<compile_context>
chip_gen: v6e
topology: v6e:2x2x1
jax: 0.10.0
libtpu: 0.0.40
codegen_flags: <defaults>
</compile_context>

<pallas_src>
import jax
import jax.numpy as jnp
from jax.experimental import pallas as pl
from jax.experimental.pallas import tpu as pltpu

LANE = 128
ROW_ALIGN = 512                       # multiple of 8/16/32 sublane packing for every dtype
BLOCK_BYTES = 8 * 1024 * 1024         # ~8 MiB per block: amortizes the ~0.35 us/step cost
VMEM_LIMIT_BYTES = 48 * 1024 * 1024   # 2xin + 2xout 8 MiB buffers = 32 MiB + headroom (< v7x 64 MiB)
MIN_GRID_STEPS = 4                    # keep both v7x TCs busy + pipeline overlapped
TINY_ELEMS = 32 * 1024                # below this, plain XLA elementwise wins on latency


def _sigmoid_kernel(x_ref, o_ref):
    x = x_ref[...].astype(jnp.float32)
    # Exact logistic: exp runs on the EUP slot, the divide is VPU work that is
    # fully hidden under the HBM DMA of this mem-bound kernel.
    y = 1.0 / (1.0 + jnp.exp(-x))
    o_ref[...] = y.astype(o_ref.dtype)


def _round_up(v, m):
    return -(-v // m) * m


def _sigmoid_body_2d(x2d):
    """Streaming sigmoid over a lane-dense [rows, 128] slab."""
    rows, _ = x2d.shape
    itemsize = jnp.dtype(x2d.dtype).itemsize

    # Dtype-aware byte budget -> rows per block (multiple of ROW_ALIGN).
    budget_rows = max(ROW_ALIGN,
                      (BLOCK_BYTES // (LANE * itemsize)) // ROW_ALIGN * ROW_ALIGN)

    if rows >= MIN_GRID_STEPS * ROW_ALIGN:
        # At least MIN_GRID_STEPS grid steps (megacore sharding + overlap),
        # aligned blocks, capped at the byte budget.  pl.cdiv grid lets Pallas
        # mask the ragged last block, so no row padding is ever needed.
        per_step = _round_up(pl.cdiv(rows, MIN_GRID_STEPS), ROW_ALIGN)
        block_rows = min(budget_rows, per_step)
    else:
        # Small slab: one full-extent block, pipeline overhead paid once.
        block_rows = rows

    grid = (pl.cdiv(rows, block_rows),)

    # Note: input_output_aliases={0: 0} could drop the output HBM allocation
    # when the caller donates x; left off here to keep the wrapper general.
    return pl.pallas_call(
        _sigmoid_kernel,
        out_shape=jax.ShapeDtypeStruct((rows, LANE), x2d.dtype),
        grid_spec=pltpu.PrefetchScalarGridSpec(
            num_scalar_prefetch=0,
            grid=grid,
            in_specs=[pl.BlockSpec((block_rows, LANE), lambda i: (i, 0))],
            out_specs=pl.BlockSpec((block_rows, LANE), lambda i: (i, 0)),
        ),
        compiler_params=pltpu.CompilerParams(
            dimension_semantics=("parallel",),
            vmem_limit_bytes=VMEM_LIMIT_BYTES,
        ),
    )(x2d)


def sigmoid_pallas(x):
    """Elementwise sigmoid of an arbitrary-shape tensor via a Pallas TPU kernel."""
    orig_shape = x.shape
    total = x.size
    if total == 0:
        return x
    if total < TINY_ELEMS:
        # Latency-bound shapes: custom-call dispatch would dominate.
        return jax.nn.sigmoid(x)

    x_flat = x.reshape(-1)
    rows = total // LANE
    tail = total - rows * LANE

    if tail == 0:
        # Common NCHW path: lossless lane-dense reshape, no pad, no slice.
        out_flat = _sigmoid_body_2d(x_flat.reshape(rows, LANE)).reshape(-1)
    else:
        # Ragged path: kernel on the lane-aligned body only; the <=127-element
        # tail is plain XLA.  Single reassembly instead of pad + slice passes.
        body = _sigmoid_body_2d(x_flat[: rows * LANE].reshape(rows, LANE)).reshape(-1)
        tail_out = jax.nn.sigmoid(x_flat[rows * LANE:])
        out_flat = jnp.concatenate([body, tail_out])

    return out_flat.reshape(orig_shape)


if __name__ == "__main__":
    key = jax.random.PRNGKey(0)

    # Primary: small NCHW input consistent with the module's forward
    # (tiny-input fast path).
    x = jax.random.normal(key, (2, 4, 16, 16), dtype=jnp.float32)
    out = sigmoid_pallas(x)
    jax.block_until_ready(out)
    ref = jax.nn.sigmoid(x)
    assert out.shape == x.shape
    assert jnp.max(jnp.abs(out - ref)) < 1e-5

    # Multi-block Pallas path: 5120 rows -> 4 grid steps, ragged last block.
    k1, k2, k3 = jax.random.split(jax.random.PRNGKey(1), 3)
    x2 = jax.random.normal(k1, (2, 16, 128, 160), dtype=jnp.float32)
    out2 = sigmoid_pallas(x2)
    jax.block_until_ready(out2)
    ref2 = jax.nn.sigmoid(x2)
    assert out2.shape == x2.shape
    assert jnp.max(jnp.abs(out2 - ref2)) < 1e-5

    # Ragged-tail path (total % 128 != 0): kernel on body + plain tail.
    x3 = jax.random.normal(k2, (1, 3, 211, 101), dtype=jnp.float32)
    out3 = sigmoid_pallas(x3)
    jax.block_until_ready(out3)
    ref3 = jax.nn.sigmoid(x3)
    assert out3.shape == x3.shape
    assert jnp.max(jnp.abs(out3 - ref3)) < 1e-5

    # bf16: exercises the dtype-aware block sizing.
    x4 = jax.random.normal(k3, (2, 8, 128, 256), dtype=jnp.bfloat16)
    out4 = sigmoid_pallas(x4)
    jax.block_until_ready(out4)
    ref4 = jax.nn.sigmoid(x4)
    assert out4.shape == x4.shape
    assert jnp.max(jnp.abs(out4.astype(jnp.float32) -
                           ref4.astype(jnp.float32))) < 8e-3

    print("KERNEL_OK")
</pallas_src>

<mosaic_0001>
module attributes {stable_mosaic.version = 11 : i64} {
  func.func @_sigmoid_kernel(%arg0: i32, %arg1: memref<1536x128xf32, #tpu.memory_space<vmem>>, %arg2: memref<1536x128xf32, #tpu.memory_space<vmem>>) attributes {dimension_semantics = [#tpu.dimension_semantics<parallel>], iteration_bounds = array<i64: 4>, scalar_prefetch = 0 : i64, scratch_operands = 0 : i64, tpu.core_type = #tpu.core_type<tc>, window_params = [{transform_indices = @transform_0, window_bounds = array<i64: 1536, 128>}, {transform_indices = @transform_1, window_bounds = array<i64: 1536, 128>}]} {
    %c0 = arith.constant 0 : index
    %c0_0 = arith.constant 0 : index
    %0 = vector.load %arg1[%c0, %c0_0] : memref<1536x128xf32, #tpu.memory_space<vmem>>, vector<1536x128xf32>
    %cst = arith.constant 0.000000e+00 : f32
    %1 = vector.broadcast %cst : f32 to vector<1536x128xf32>
    %2 = arith.subf %1, %0 : vector<1536x128xf32>
    %3 = math.exp %2 : vector<1536x128xf32>
    %cst_1 = arith.constant 1.000000e+00 : f32
    %4 = vector.broadcast %cst_1 : f32 to vector<1536x128xf32>
    %5 = arith.addf %4, %3 : vector<1536x128xf32>
    %cst_2 = arith.constant 1.000000e+00 : f32
    %6 = vector.broadcast %cst_2 : f32 to vector<1536x128xf32>
    %7 = arith.divf %6, %5 : vector<1536x128xf32>
    %c0_3 = arith.constant 0 : index
    %c0_4 = arith.constant 0 : index
    %8 = vector.load %arg2[%c0_3, %c0_4] : memref<1536x128xf32, #tpu.memory_space<vmem>>, vector<1536x128xf32>
    tpu.vector_store %arg2[%c0_3, %c0_4], %7 {strides = array<i32>} : memref<1536x128xf32, #tpu.memory_space<vmem>>, vector<1536x128xf32>,
    return
  }
  func.func @transform_0(%arg0: i32) -> (i32, i32) {
    %c0_i32 = arith.constant 0 : i32
    %c0_i32_0 = arith.constant 0 : i32
    return %arg0, %c0_i32 : i32, i32
  }
  func.func @transform_1(%arg0: i32) -> (i32, i32) {
    %c0_i32 = arith.constant 0 : i32
    %c0_i32_0 = arith.constant 0 : i32
    return %arg0, %c0_i32 : i32, i32
  }
}

</mosaic_0001>

<llo_original>
// kernel: tpu_custom_call.1
$region0: #{tpu_custom_call.1}
  #allocation0 [shape = 'u32[]', space=smem, size = 0x4, offset = 0x4, fixed_abs, tag = 'smem constant byte address 0x4 - core index']
  #allocation1 [shape = 'u32[144,128]{1,0:T(1,128)}', space=vmem, size = 0x12000, scoped, tag = 'internal scratch']
  %s0 = inlined_call_operand.hbm [shape: f32[5120,128], index: 0, kind: input, shape index: {}]
  %s1 = inlined_call_operand.hbm [shape: f32[5120,128], index: 1, kind: output, shape index: {}]
  %s2 = sld [smem:[#allocation0]]
  $region41: #{tpu_custom_call.1} parent=0
    _
  %s4 = ssub.s32 1, %s2
  %s5 = scalar_select 0, %s4, %s2
  $region1: #{tpu_custom_call.1} parent=0
    #allocation2 [shape = 'u8[1572864]{0}', space=vmem, size = 0x180000, scoped, tag = 'input window, operand 0']
    #allocation3 [shape = 's32[2]{0}', space=sflag, size = 0x8, scoped, tag = 'scoped memory for tpu_custom_call.1']
    #allocation4 [shape = 's32[2]{0}', space=sflag, size = 0x8, scoped, tag = 'scoped memory for tpu_custom_call.1']
    #allocation5 [shape = 'u8[1572864]{0}', space=vmem, size = 0x180000, scoped, tag = 'output window, operand 0']
    %6 = vsyncpa [#allocation3], 0
    %s7 = scalar_lea.sflag [#allocation3], 1
    %8 = vsyncpa %s7, 0
    %9 = vsyncpa [#allocation4], 0
    %s10 = scalar_lea.sflag [#allocation4], 1
    %11 = vsyncpa %s10, 0
    loop: start=0, step=1, limit=6
    $region2: #{tpu_custom_call.1} parent=1 // loop_pre_header
      _
    $region3: #{tpu_custom_call.1} parent=1 // loop_header
      %s13 = sphi 0, %s17
      %p14 = scmp.ge.s32.totalorder %s13, 6
      %s23 = sphi 0, %s25
      %s26 = sphi 0, %s23
      %s27 = sphi 0, %s26
      %s43 = sphi 0, %s27
      %s49 = sphi 0, %s51
      %s52 = sphi 0, %s49
      %s53 = sphi 0, %s52
      %s69 = sphi 0, %s53
    $region4: #{tpu_custom_call.1} parent=1 // loop_header_branch
      %16 = sbr.rel (%p14) target = $region8
    $region5: #{tpu_custom_call.1} parent=1 // loop_body
      %s18 = ssub.s32 %s13, 1
      %s19 = ssub.s32 %s13, 2
      %s20 = sadd.s32 %s13, 1
      %s21 = ssub.s32 %s13, %s20
      %p22 = scmp.eq.s32.totalorder %s21, 0
      %s24 = sadd.s32 %s23, 1
      %s25 = scalar_select %p22, %s23, %s24
      %p28 = pneg %p22
      %p29 = scmp.eq.s32.totalorder %s13, 3
      %p30 = por %p28, %p29
      %p31 = scmp.ne.s32.totalorder %s23, %s26
      %p32 = scmp.eq.s32.totalorder %s13, 0
      %p33 = por %p31, %p32
      %p34 = scmp.ne.s32.totalorder %s23, %s26
      %p35 = scmp.eq.s32.totalorder %s18, 3
      %p36 = por %p34, %p35
      %p37 = scmp.ne.s32.totalorder %s26, %s27
      %p38 = scmp.eq.s32.totalorder %s18, 0
      %p39 = por %p37, %p38
      %p40 = scmp.ne.s32.totalorder %s26, %s27
      %p41 = scmp.eq.s32.totalorder %s19, 3
      %p42 = por %p40, %p41
      %p44 = scmp.ne.s32.totalorder %s27, %s43
      %p45 = scmp.eq.s32.totalorder %s19, 0
      %p46 = por %p44, %p45
      %s47 = ssub.s32 %s13, %s20
      %p48 = scmp.eq.s32.totalorder %s47, 0
      %s50 = sadd.s32 %s49, 1
      %s51 = scalar_select %p48, %s49, %s50
      %p54 = pneg %p48
      %p55 = scmp.eq.s32.totalorder %s13, 3
      %p56 = por %p54, %p55
      %p57 = scmp.ne.s32.totalorder %s49, %s52
      %p58 = scmp.eq.s32.totalorder %s13, 0
      %p59 = por %p57, %p58
      %p60 = scmp.ne.s32.totalorder %s49, %s52
      %p61 = scmp.eq.s32.totalorder %s18, 3
      %p62 = por %p60, %p61
      %p63 = scmp.ne.s32.totalorder %s52, %s53
      %p64 = scmp.eq.s32.totalorder %s18, 0
      %p65 = por %p63, %p64
      %p66 = scmp.ne.s32.totalorder %s52, %s53
      %p67 = scmp.eq.s32.totalorder %s19, 3
      %p68 = por %p66, %p67
      %p70 = scmp.ne.s32.totalorder %s53, %s69
      %p71 = scmp.eq.s32.totalorder %s19, 0
      %p72 = por %p70, %p71
      %p73 = scmp.le.s32.totalorder 1, %s13
      %p74 = scmp.lt.s32.totalorder %s13, 5
      %p75 = pnand %p73, %p74
      %p76 = pneg %p75
      // Predicated region
      $region9: #{tpu_custom_call.1} parent=5 // pred_check
        _
      $region10: #{tpu_custom_call.1} parent=5 // pred_check_branch
        %78 = sbr.rel (%p75) target = $region12
      $region11: #{tpu_custom_call.1} parent=5 // pred_region
        %s79 = ssub.s32 %s13, 1
      $region12: #{tpu_custom_call.1} parent=5 // pred_fallthru
        _
      %p80 = scmp.lt.s32.totalorder %s13, 4
      // Predicated region
      $region13: #{tpu_custom_call.1} parent=5 // pred_check
        %p81 = pneg %p80
      $region14: #{tpu_custom_call.1} parent=5 // pred_check_branch
        %83 = sbr.rel (%p81) target = $region16
      $region15: #{tpu_custom_call.1} parent=5 // pred_region
        // Predicated region
        $region17: #{tpu_custom_call.1} parent=15 // pred_check
          %p84 = pneg %p33
        $region18: #{tpu_custom_call.1} parent=15 // pred_check_branch
          %86 = sbr.rel (%p84) target = $region20
        $region19: #{tpu_custom_call.1} parent=15 // pred_region
          %s87 = sand.u32 %s23, 1
          %s88 = scalar_lea.sflag [#allocation3], %s87
          %s89 = sand.u32 %s23, 1
          %s90 = smul.addr %s89, 1536
          %s91 = scalar_lea.vmem [#allocation2], %s90
          %s92 = smul.u32 192, %s13
          %s93 = ssub.s32 640, %s92
          %p94 = scmp.lt.s32.totalorder %s93, 192
          %s95 = scalar_select %p94, %s93, 192
          %s96 = smul.u32 128, %s95
          %s98 = ssub.s32 24576, %s96
          %99 = vsyncadd %s88, %s98
          %p100 = scmp.ne.s32.totalorder 0, %s96
          %s101 = smul.addr %s92, 128
          %s102 = scalar_lea.hbm %s0, %s101
          %s103 = smul.u32 8, %s95
          %s104 = sshll.u32 %s91, 4
          %s105 = int_to_ptr.vmem [resolvable:$true] %s104
          %s106 = sshll.u32 %s103, 4
          %110 = dma.hbm_to_vmem [thread:$0]  (%p100), %s102, %s106, %s105, %s88, 128, 128, 8
        $region20: #{tpu_custom_call.1} parent=15 // pred_fallthru
          _
      $region16: #{tpu_custom_call.1} parent=5 // pred_fallthru
        _
      %p111 = scmp.le.s32.totalorder 1, %s13
      %p112 = scmp.lt.s32.totalorder %s13, 5
      %p113 = pnand %p111, %p112
      %p114 = pneg %p113
      // Predicated region
      $region21: #{tpu_custom_call.1} parent=5 // pred_check
        _
      $region22: #{tpu_custom_call.1} parent=5 // pred_check_branch
        %116 = sbr.rel (%p113) target = $region24
      $region23: #{tpu_custom_call.1} parent=5 // pred_region
        %s117 = ssub.s32 %s13, 1
        %s118 = sand.u32 %s26, 1
        %s119 = scalar_lea.sflag [#allocation3], %s118
        %s120 = sand.u32 %s26, 1
        %s121 = smul.addr %s120, 1536
        %s122 = scalar_lea.vmem [#allocation2], %s121
        // Predicated region
        $region25: #{tpu_custom_call.1} parent=23 // pred_check
          %p123 = pneg %p39
        $region26: #{tpu_custom_call.1} parent=23 // pred_check_branch
          %125 = sbr.rel (%p123) target = $region28
        $region27: #{tpu_custom_call.1} parent=23 // pred_region
          %126 = dma.done %s119, 24576
        $region28: #{tpu_custom_call.1} parent=23 // pred_fallthru
          _
        %s127 = sand.u32 %s26, 1
        %s128 = scalar_lea.sflag [#allocation3], %s127
        %s129 = sand.u32 %s26, 1
        %s130 = smul.addr %s129, 1536
        %s131 = scalar_lea.vmem [#allocation2], %s130
        %p132 = pneg %p39
        %p133 = pneg %p36
        %p134 = pneg %p65
        %p135 = pneg %p62
        %s136 = sand.u32 %s52, 1
        %s137 = scalar_lea.sflag [#allocation4], %s136
        %s138 = sand.u32 %s52, 1
        %s139 = smul.addr %s138, 1536
        %s140 = scalar_lea.vmem [#allocation5], %s139
        %s141 = smul.u32 192, %s18
        %s142 = ssub.s32 640, %s141
        %p143 = scmp.lt.s32.totalorder %s142, 192
        %s144 = scalar_select %p143, %s142, 192
        %s145 = smul.u32 128, %s144
        %s146 = smul.u32 192, %s18
        %s147 = ssub.s32 640, %s146
        %p148 = scmp.lt.s32.totalorder %s147, 192
        %s149 = scalar_select %p148, %s147, 192
        %s150 = smul.u32 128, %s149
        %v151 = vld [vmem:[%s122] sm:$0xff]
        %v152 = vld [vmem:[%s122 + $0x8] sm:$0xff]
        %v153 = vld [vmem:[%s122 + $0x10] sm:$0xff]
        %v154 = vld [vmem:[%s122 + $0x18] sm:$0xff]
        %v155 = vld [vmem:[%s122 + $0x20] sm:$0xff]
        %v156 = vld [vmem:[%s122 + $0x28] sm:$0xff]
        %v157 = vld [vmem:[%s122 + $0x30] sm:$0xff]
        %v158 = vld [vmem:[%s122 + $0x38] sm:$0xff]
        %v159 = vld [vmem:[%s122 + $0x40] sm:$0xff]
        %v160 = vld [vmem:[%s122 + $0x48] sm:$0xff]
        %v161 = vld [vmem:[%s122 + $0x50] sm:$0xff]
        %v162 = vld [vmem:[%s122 + $0x58] sm:$0xff]
        %v163 = vld [vmem:[%s122 + $0x60] sm:$0xff]
        %v164 = vld [vmem:[%s122 + $0x68] sm:$0xff]
        %v165 = vld [vmem:[%s122 + $0x70] sm:$0xff]
        %v166 = vld [vmem:[%s122 + $0x78] sm:$0xff]
        %v167 = vld [vmem:[%s122 + $0x80] sm:$0xff]
        %v168 = vld [vmem:[%s122 + $0x88] sm:$0xff]
        %v169 = vld [vmem:[%s122 + $0x90] sm:$0xff]
        %v170 = vld [vmem:[%s122 + $0x98] sm:$0xff]
        %v171 = vld [vmem:[%s122 + $0xa0] sm:$0xff]
        %v172 = vld [vmem:[%s122 + $0xa8] sm:$0xff]
        %v173 = vld [vmem:[%s122 + $0xb0] sm:$0xff]
        %v174 = vld [vmem:[%s122 + $0xb8] sm:$0xff]
        %v175 = vld [vmem:[%s122 + $0xc0] sm:$0xff]
        %v176 = vld [vmem:[%s122 + $0xc8] sm:$0xff]
        %v177 = vld [vmem:[%s122 + $0xd0] sm:$0xff]
        %v178 = vld [vmem:[%s122 + $0xd8] sm:$0xff]
        %v179 = vld [vmem:[%s122 + $0xe0] sm:$0xff]
        %v180 = vld [vmem:[%s122 + $0xe8] sm:$0xff]
        %v181 = vld [vmem:[%s122 + $0xf0] sm:$0xff]
        %v182 = vld [vmem:[%s122 + $0xf8] sm:$0xff]
        %v183 = vld [vmem:[%s122 + $0x100] sm:$0xff]
        %v184 = vld [vmem:[%s122 + $0x108] sm:$0xff]
        %v185 = vld [vmem:[%s122 + $0x110] sm:$0xff]
        %v186 = vld [vmem:[%s122 + $0x118] sm:$0xff]
        %v187 = vld [vmem:[%s122 + $0x120] sm:$0xff]
        %v188 = vld [vmem:[%s122 + $0x128] sm:$0xff]
        %v189 = vld [vmem:[%s122 + $0x130] sm:$0xff]
        %v190 = vld [vmem:[%s122 + $0x138] sm:$0xff]
        %v191 = vld [vmem:[%s122 + $0x140] sm:$0xff]
        %v192 = vld [vmem:[%s122 + $0x148] sm:$0xff]
        %v193 = vld [vmem:[%s122 + $0x150] sm:$0xff]
        %v194 = vld [vmem:[%s122 + $0x158] sm:$0xff]
        %v195 = vld [vmem:[%s122 + $0x160] sm:$0xff]
        %v196 = vld [vmem:[%s122 + $0x168] sm:$0xff]
        %v197 = vld [vmem:[%s122 + $0x170] sm:$0xff]
        %v198 = vld [vmem:[%s122 + $0x178] sm:$0xff]
        %v199 = vld [vmem:[%s122 + $0x180] sm:$0xff]
        %v200 = vld [vmem:[%s122 + $0x188] sm:$0xff]
        %v201 = vld [vmem:[%s122 + $0x190] sm:$0xff]
        %v202 = vld [vmem:[%s122 + $0x198] sm:$0xff]
        %v203 = vld [vmem:[%s122 + $0x1a0] sm:$0xff]
        %v204 = vld [vmem:[%s122 + $0x1a8] sm:$0xff]
        %v205 = vld [vmem:[%s122 + $0x1b0] sm:$0xff]
        %v206 = vld [vmem:[%s122 + $0x1b8] sm:$0xff]
        %v207 = vld [vmem:[%s122 + $0x1c0] sm:$0xff]
        %v208 = vld [vmem:[%s122 + $0x1c8] sm:$0xff]
        %v209 = vld [vmem:[%s122 + $0x1d0] sm:$0xff]
        %v210 = vld [vmem:[%s122 + $0x1d8] sm:$0xff]
        %v211 = vld [vmem:[%s122 + $0x1e0] sm:$0xff]
        %v212 = vld [vmem:[%s122 + $0x1e8] sm:$0xff]
        %v213 = vld [vmem:[%s122 + $0x1f0] sm:$0xff]
        %v214 = vld [vmem:[%s122 + $0x1f8] sm:$0xff]
        %v215 = vld [vmem:[%s122 + $0x200] sm:$0xff]
        %v216 = vld [vmem:[%s122 + $0x208] sm:$0xff]
        %v217 = vld [vmem:[%s122 + $0x210] sm:$0xff]
        %v218 = vld [vmem:[%s122 + $0x218] sm:$0xff]
        %v219 = vld [vmem:[%s122 + $0x220] sm:$0xff]
        %v220 = vld [vmem:[%s122 + $0x228] sm:$0xff]
        %v221 = vld [vmem:[%s122 + $0x230] sm:$0xff]
        %v222 = vld [vmem:[%s122 + $0x238] sm:$0xff]
        %v223 = vld [vmem:[%s122 + $0x240] sm:$0xff]
        %v224 = vld [vmem:[%s122 + $0x248] sm:$0xff]
        %v225 = vld [vmem:[%s122 + $0x250] sm:$0xff]
        %v226 = vld [vmem:[%s122 + $0x258] sm:$0xff]
        %v227 = vld [vmem:[%s122 + $0x260] sm:$0xff]
        %v228 = vld [vmem:[%s122 + $0x268] sm:$0xff]
        %v229 = vld [vmem:[%s122 + $0x270] sm:$0xff]
        %v230 = vld [vmem:[%s122 + $0x278] sm:$0xff]
        %v231 = vld [vmem:[%s122 + $0x280] sm:$0xff]
        %v232 = vld [vmem:[%s122 + $0x288] sm:$0xff]
        %v233 = vld [vmem:[%s122 + $0x290] sm:$0xff]
        %v234 = vld [vmem:[%s122 + $0x298] sm:$0xff]
        %v235 = vld [vmem:[%s122 + $0x2a0] sm:$0xff]
        %v236 = vld [vmem:[%s122 + $0x2a8] sm:$0xff]
        %v237 = vld [vmem:[%s122 + $0x2b0] sm:$0xff]
        %v238 = vld [vmem:[%s122 + $0x2b8] sm:$0xff]
        %v239 = vld [vmem:[%s122 + $0x2c0] sm:$0xff]
        %v240 = vld [vmem:[%s122 + $0x2c8] sm:$0xff]
        %v241 = vld [vmem:[%s122 + $0x2d0] sm:$0xff]
        %v242 = vld [vmem:[%s122 + $0x2d8] sm:$0xff]
        %v243 = vld [vmem:[%s122 + $0x2e0] sm:$0xff]
        %v244 = vld [vmem:[%s122 + $0x2e8] sm:$0xff]
        %v245 = vld [vmem:[%s122 + $0x2f0] sm:$0xff]
        %v246 = vld [vmem:[%s122 + $0x2f8] sm:$0xff]
        %v247 = vld [vmem:[%s122 + $0x300] sm:$0xff]
        %v248 = vld [vmem:[%s122 + $0x308] sm:$0xff]
        %v249 = vld [vmem:[%s122 + $0x310] sm:$0xff]
        %v250 = vld [vmem:[%s122 + $0x318] sm:$0xff]
        %v251 = vld [vmem:[%s122 + $0x320] sm:$0xff]
        %v252 = vld [vmem:[%s122 + $0x328] sm:$0xff]
        %v253 = vld [vmem:[%s122 + $0x330] sm:$0xff]
        %v254 = vld [vmem:[%s122 + $0x338] sm:$0xff]
        %v255 = vld [vmem:[%s122 + $0x340] sm:$0xff]
        %v256 = vld [vmem:[%s122 + $0x348] sm:$0xff]
        %v257 = vld [vmem:[%s122 + $0x350] sm:$0xff]
        %v258 = vld [vmem:[%s122 + $0x358] sm:$0xff]
        %v259 = vld [vmem:[%s122 + $0x360] sm:$0xff]
        %v260 = vld [vmem:[%s122 + $0x368] sm:$0xff]
        %v261 = vld [vmem:[%s122 + $0x370] sm:$0xff]
        %v262 = vld [vmem:[%s122 + $0x378] sm:$0xff]
        %v263 = vld [vmem:[%s122 + $0x380] sm:$0xff]
        %v264 = vld [vmem:[%s122 + $0x388] sm:$0xff]
        %v265 = vld [vmem:[%s122 + $0x390] sm:$0xff]
        %v266 = vld [vmem:[%s122 + $0x398] sm:$0xff]
        %v267 = vld [vmem:[%s122 + $0x3a0] sm:$0xff]
        %v268 = vld [vmem:[%s122 + $0x3a8] sm:$0xff]
        %v269 = vld [vmem:[%s122 + $0x3b0] sm:$0xff]
        %v270 = vld [vmem:[%s122 + $0x3b8] sm:$0xff]
        %v271 = vld [vmem:[%s122 + $0x3c0] sm:$0xff]
        %v272 = vld [vmem:[%s122 + $0x3c8] sm:$0xff]
        %v273 = vld [vmem:[%s122 + $0x3d0] sm:$0xff]
        %v274 = vld [vmem:[%s122 + $0x3d8] sm:$0xff]
        %v275 = vld [vmem:[%s122 + $0x3e0] sm:$0xff]
        %v276 = vld [vmem:[%s122 + $0x3e8] sm:$0xff]
        %v277 = vld [vmem:[%s122 + $0x3f0] sm:$0xff]
        %v278 = vld [vmem:[%s122 + $0x3f8] sm:$0xff]
        %v279 = vld [vmem:[%s122 + $0x400] sm:$0xff]
        %v280 = vld [vmem:[%s122 + $0x408] sm:$0xff]
        %v281 = vld [vmem:[%s122 + $0x410] sm:$0xff]
        %v282 = vld [vmem:[%s122 + $0x418] sm:$0xff]
        %v283 = vld [vmem:[%s122 + $0x420] sm:$0xff]
        %v284 = vld [vmem:[%s122 + $0x428] sm:$0xff]
        %v285 = vld [vmem:[%s122 + $0x430] sm:$0xff]
        %v286 = vld [vmem:[%s122 + $0x438] sm:$0xff]
        %v287 = vld [vmem:[%s122 + $0x440] sm:$0xff]
        %v288 = vld [vmem:[%s122 + $0x448] sm:$0xff]
        %v289 = vld [vmem:[%s122 + $0x450] sm:$0xff]
        %v290 = vld [vmem:[%s122 + $0x458] sm:$0xff]
        %v291 = vld [vmem:[%s122 + $0x460] sm:$0xff]
        %v292 = vld [vmem:[%s122 + $0x468] sm:$0xff]
        %v293 = vld [vmem:[%s122 + $0x470] sm:$0xff]
        %v294 = vld [vmem:[%s122 + $0x478] sm:$0xff]
        %v295 = vld [vmem:[%s122 + $0x480] sm:$0xff]
        %v296 = vld [vmem:[%s122 + $0x488] sm:$0xff]
        %v297 = vld [vmem:[%s122 + $0x490] sm:$0xff]
        %v298 = vld [vmem:[%s122 + $0x498] sm:$0xff]
        %v299 = vld [vmem:[%s122 + $0x4a0] sm:$0xff]
        %v300 = vld [vmem:[%s122 + $0x4a8] sm:$0xff]
        %v301 = vld [vmem:[%s122 + $0x4b0] sm:$0xff]
        %v302 = vld [vmem:[%s122 + $0x4b8] sm:$0xff]
        %v303 = vld [vmem:[%s122 + $0x4c0] sm:$0xff]
        %v304 = vld [vmem:[%s122 + $0x4c8] sm:$0xff]
        %v305 = vld [vmem:[%s122 + $0x4d0] sm:$0xff]
        %v306 = vld [vmem:[%s122 + $0x4d8] sm:$0xff]
        %v307 = vld [vmem:[%s122 + $0x4e0] sm:$0xff]
        %v308 = vld [vmem:[%s122 + $0x4e8] sm:$0xff]
        %v309 = vld [vmem:[%s122 + $0x4f0] sm:$0xff]
        %v310 = vld [vmem:[%s122 + $0x4f8] sm:$0xff]
        %v311 = vld [vmem:[%s122 + $0x500] sm:$0xff]
        %v312 = vld [vmem:[%s122 + $0x508] sm:$0xff]
        %v313 = vld [vmem:[%s122 + $0x510] sm:$0xff]
        %v314 = vld [vmem:[%s122 + $0x518] sm:$0xff]
        %v315 = vld [vmem:[%s122 + $0x520] sm:$0xff]
        %v316 = vld [vmem:[%s122 + $0x528] sm:$0xff]
        %v317 = vld [vmem:[%s122 + $0x530] sm:$0xff]
        %v318 = vld [vmem:[%s122 + $0x538] sm:$0xff]
        %v319 = vld [vmem:[%s122 + $0x540] sm:$0xff]
        %v320 = vld [vmem:[%s122 + $0x548] sm:$0xff]
        %v321 = vld [vmem:[%s122 + $0x550] sm:$0xff]
        %v322 = vld [vmem:[%s122 + $0x558] sm:$0xff]
        %v323 = vld [vmem:[%s122 + $0x560] sm:$0xff]
        %v324 = vld [vmem:[%s122 + $0x568] sm:$0xff]
        %v325 = vld [vmem:[%s122 + $0x570] sm:$0xff]
        %v326 = vld [vmem:[%s122 + $0x578] sm:$0xff]
        %v327 = vld [vmem:[%s122 + $0x580] sm:$0xff]
        %v328 = vld [vmem:[%s122 + $0x588] sm:$0xff]
        %v329 = vld [vmem:[%s122 + $0x590] sm:$0xff]
        %v330 = vld [vmem:[%s122 + $0x598] sm:$0xff]
        %v331 = vld [vmem:[%s122 + $0x5a0] sm:$0xff]
        %v332 = vld [vmem:[%s122 + $0x5a8] sm:$0xff]
        %v333 = vld [vmem:[%s122 + $0x5b0] sm:$0xff]
        %v334 = vld [vmem:[%s122 + $0x5b8] sm:$0xff]
        %v335 = vld [vmem:[%s122 + $0x5c0] sm:$0xff]
        %v336 = vld [vmem:[%s122 + $0x5c8] sm:$0xff]
        %v337 = vld [vmem:[%s122 + $0x5d0] sm:$0xff]
        %v338 = vld [vmem:[%s122 + $0x5d8] sm:$0xff]
        %v339 = vld [vmem:[%s122 + $0x5e0] sm:$0xff]
        %v340 = vld [vmem:[%s122 + $0x5e8] sm:$0xff]
        %v341 = vld [vmem:[%s122 + $0x5f0] sm:$0xff]
        %v342 = vld [vmem:[%s122 + $0x5f8] sm:$0xff]
        %v343 = vsub.f32 0.0, %v151
        %v344 = vsub.f32 0.0, %v152
        %v345 = vsub.f32 0.0, %v153
        %v346 = vsub.f32 0.0, %v154
        %v347 = vsub.f32 0.0, %v155
        %v348 = vsub.f32 0.0, %v156
        %v349 = vsub.f32 0.0, %v157
        %v350 = vsub.f32 0.0, %v158
        %v351 = vsub.f32 0.0, %v159
        %v352 = vsub.f32 0.0, %v160
        %v353 = vsub.f32 0.0, %v161
        %v354 = vsub.f32 0.0, %v162
        %v355 = vsub.f32 0.0, %v163
        %v356 = vsub.f32 0.0, %v164
        %v357 = vsub.f32 0.0, %v165
        %v358 = vsub.f32 0.0, %v166
        %v359 = vsub.f32 0.0, %v167
        %v360 = vsub.f32 0.0, %v168
        %v361 = vsub.f32 0.0, %v169
        %v362 = vsub.f32 0.0, %v170
        %v363 = vsub.f32 0.0, %v171
        %v364 = vsub.f32 0.0, %v172
        %v365 = vsub.f32 0.0, %v173
        %v366 = vsub.f32 0.0, %v174
        %v367 = vsub.f32 0.0, %v175
        %v368 = vsub.f32 0.0, %v176
        %v369 = vsub.f32 0.0, %v177
        %v370 = vsub.f32 0.0, %v178
        %v371 = vsub.f32 0.0, %v179
        %v372 = vsub.f32 0.0, %v180
        %v373 = vsub.f32 0.0, %v181
        %v374 = vsub.f32 0.0, %v182
        %v375 = vsub.f32 0.0, %v183
        %v376 = vsub.f32 0.0, %v184
        %v377 = vsub.f32 0.0, %v185
        %v378 = vsub.f32 0.0, %v186
        %v379 = vsub.f32 0.0, %v187
        %v380 = vsub.f32 0.0, %v188
        %v381 = vsub.f32 0.0, %v189
        %v382 = vsub.f32 0.0, %v190
        %v383 = vsub.f32 0.0, %v191
        %v384 = vsub.f32 0.0, %v192
        %v385 = vsub.f32 0.0, %v193
        %v386 = vsub.f32 0.0, %v194
        %v387 = vsub.f32 0.0, %v195
        %v388 = vsub.f32 0.0, %v196
        %v389 = vsub.f32 0.0, %v197
        %v390 = vsub.f32 0.0, %v198
        %v391 = vsub.f32 0.0, %v199
        %v392 = vsub.f32 0.0, %v200
        %v393 = vsub.f32 0.0, %v201
        %v394 = vsub.f32 0.0, %v202
        %v395 = vsub.f32 0.0, %v203
        %v396 = vsub.f32 0.0, %v204
        %v397 = vsub.f32 0.0, %v205
        %v398 = vsub.f32 0.0, %v206
        %v399 = vsub.f32 0.0, %v207
        %v400 = vsub.f32 0.0, %v208
        %v401 = vsub.f32 0.0, %v209
        %v402 = vsub.f32 0.0, %v210
        %v403 = vsub.f32 0.0, %v211
        %v404 = vsub.f32 0.0, %v212
        %v405 = vsub.f32 0.0, %v213
        %v406 = vsub.f32 0.0, %v214
        %v407 = vsub.f32 0.0, %v215
        %v408 = vsub.f32 0.0, %v216
        %v409 = vsub.f32 0.0, %v217
        %v410 = vsub.f32 0.0, %v218
        %v411 = vsub.f32 0.0, %v219
        %v412 = vsub.f32 0.0, %v220
        %v413 = vsub.f32 0.0, %v221
        %v414 = vsub.f32 0.0, %v222
        %v415 = vsub.f32 0.0, %v223
        %v416 = vsub.f32 0.0, %v224
        %v417 = vsub.f32 0.0, %v225
        %v418 = vsub.f32 0.0, %v226
        %v419 = vsub.f32 0.0, %v227
        %v420 = vsub.f32 0.0, %v228
        %v421 = vsub.f32 0.0, %v229
        %v422 = vsub.f32 0.0, %v230
        %v423 = vsub.f32 0.0, %v231
        %v424 = vsub.f32 0.0, %v232
        %v425 = vsub.f32 0.0, %v233
        %v426 = vsub.f32 0.0, %v234
        %v427 = vsub.f32 0.0, %v235
        %v428 = vsub.f32 0.0, %v236
        %v429 = vsub.f32 0.0, %v237
        %v430 = vsub.f32 0.0, %v238
        %v431 = vsub.f32 0.0, %v239
        %v432 = vsub.f32 0.0, %v240
        %v433 = vsub.f32 0.0, %v241
        %v434 = vsub.f32 0.0, %v242
        %v435 = vsub.f32 0.0, %v243
        %v436 = vsub.f32 0.0, %v244
        %v437 = vsub.f32 0.0, %v245
        %v438 = vsub.f32 0.0, %v246
        %v439 = vsub.f32 0.0, %v247
        %v440 = vsub.f32 0.0, %v248
        %v441 = vsub.f32 0.0, %v249
        %v442 = vsub.f32 0.0, %v250
        %v443 = vsub.f32 0.0, %v251
        %v444 = vsub.f32 0.0, %v252
        %v445 = vsub.f32 0.0, %v253
        %v446 = vsub.f32 0.0, %v254
        %v447 = vsub.f32 0.0, %v255
        %v448 = vsub.f32 0.0, %v256
        %v449 = vsub.f32 0.0, %v257
        %v450 = vsub.f32 0.0, %v258
        %v451 = vsub.f32 0.0, %v259
        %v452 = vsub.f32 0.0, %v260
        %v453 = vsub.f32 0.0, %v261
        %v454 = vsub.f32 0.0, %v262
        %v455 = vsub.f32 0.0, %v263
        %v456 = vsub.f32 0.0, %v264
        %v457 = vsub.f32 0.0, %v265
        %v458 = vsub.f32 0.0, %v266
        %v459 = vsub.f32 0.0, %v267
        %v460 = vsub.f32 0.0, %v268
        %v461 = vsub.f32 0.0, %v269
        %v462 = vsub.f32 0.0, %v270
        %v463 = vsub.f32 0.0, %v271
        %v464 = vsub.f32 0.0, %v272
        %v465 = vsub.f32 0.0, %v273
        %v466 = vsub.f32 0.0, %v274
        %v467 = vsub.f32 0.0, %v275
        %v468 = vsub.f32 0.0, %v276
        %v469 = vsub.f32 0.0, %v277
        %v470 = vsub.f32 0.0, %v278
        %v471 = vsub.f32 0.0, %v279
        %v472 = vsub.f32 0.0, %v280
        %v473 = vsub.f32 0.0, %v281
        %v474 = vsub.f32 0.0, %v282
        %v475 = vsub.f32 0.0, %v283
        %v476 = vsub.f32 0.0, %v284
        %v477 = vsub.f32 0.0, %v285
        %v478 = vsub.f32 0.0, %v286
        %v479 = vsub.f32 0.0, %v287
        %v480 = vsub.f32 0.0, %v288
        %v481 = vsub.f32 0.0, %v289
        %v482 = vsub.f32 0.0, %v290
        %v483 = vsub.f32 0.0, %v291
        %v484 = vsub.f32 0.0, %v292
        %v485 = vsub.f32 0.0, %v293
        %v486 = vsub.f32 0.0, %v294
        %v487 = vsub.f32 0.0, %v295
        %v488 = vsub.f32 0.0, %v296
        %v489 = vsub.f32 0.0, %v297
        %v490 = vsub.f32 0.0, %v298
        %v491 = vsub.f32 0.0, %v299
        %v492 = vsub.f32 0.0, %v300
        %v493 = vsub.f32 0.0, %v301
        %v494 = vsub.f32 0.0, %v302
        %v495 = vsub.f32 0.0, %v303
        %v496 = vsub.f32 0.0, %v304
        %v497 = vsub.f32 0.0, %v305
        %v498 = vsub.f32 0.0, %v306
        %v499 = vsub.f32 0.0, %v307
        %v500 = vsub.f32 0.0, %v308
        %v501 = vsub.f32 0.0, %v309
        %v502 = vsub.f32 0.0, %v310
        %v503 = vsub.f32 0.0, %v311
        %v504 = vsub.f32 0.0, %v312
        %v505 = vsub.f32 0.0, %v313
        %v506 = vsub.f32 0.0, %v314
        %v507 = vsub.f32 0.0, %v315
        %v508 = vsub.f32 0.0, %v316
        %v509 = vsub.f32 0.0, %v317
        %v510 = vsub.f32 0.0, %v318
        %v511 = vsub.f32 0.0, %v319
        %v512 = vsub.f32 0.0, %v320
        %v513 = vsub.f32 0.0, %v321
        %v514 = vsub.f32 0.0, %v322
        %v515 = vsub.f32 0.0, %v323
        %v516 = vsub.f32 0.0, %v324
        %v517 = vsub.f32 0.0, %v325
        %v518 = vsub.f32 0.0, %v326
        %v519 = vsub.f32 0.0, %v327
        %v520 = vsub.f32 0.0, %v328
        %v521 = vsub.f32 0.0, %v329
        %v522 = vsub.f32 0.0, %v330
        %v523 = vsub.f32 0.0, %v331
        %v524 = vsub.f32 0.0, %v332
        %v525 = vsub.f32 0.0, %v333
        %v526 = vsub.f32 0.0, %v334
        %v527 = vsub.f32 0.0, %v335
        %v528 = vsub.f32 0.0, %v336
        %v529 = vsub.f32 0.0, %v337
        %v530 = vsub.f32 0.0, %v338
        %v531 = vsub.f32 0.0, %v339
        %v532 = vsub.f32 0.0, %v340
        %v533 = vsub.f32 0.0, %v341
        %v534 = vsub.f32 0.0, %v342
        %v535 = vmul.f32 %v343, 1.442695
        %v536 = vpow.pop %v535
        %v537 = vmul.f32 %v344, 1.442695
        %v538 = vpow.pop %v537
        %v539 = vmul.f32 %v345, 1.442695
        %v540 = vpow.pop %v539
        %v541 = vmul.f32 %v346, 1.442695
        %v542 = vpow.pop %v541
        %v543 = vmul.f32 %v347, 1.442695
        %v544 = vpow.pop %v543
        %v545 = vmul.f32 %v348, 1.442695
        %v546 = vpow.pop %v545
        %v547 = vmul.f32 %v349, 1.442695
        %v548 = vpow.pop %v547
        %v549 = vmul.f32 %v350, 1.442695
        %v550 = vpow.pop %v549
        %v551 = vmul.f32 %v351, 1.442695
        %v552 = vpow.pop %v551
        %v553 = vmul.f32 %v352, 1.442695
        %v554 = vpow.pop %v553
        %v555 = vmul.f32 %v353, 1.442695
        %v556 = vpow.pop %v555
        %v557 = vmul.f32 %v354, 1.442695
        %v558 = vpow.pop %v557
        %v559 = vmul.f32 %v355, 1.442695
        %v560 = vpow.pop %v559
        %v561 = vmul.f32 %v356, 1.442695
        %v562 = vpow.pop %v561
        %v563 = vmul.f32 %v357, 1.442695
        %v564 = vpow.pop %v563
        %v565 = vmul.f32 %v358, 1.442695
        %v566 = vpow.pop %v565
        %v567 = vmul.f32 %v359, 1.442695
        %v568 = vpow.pop %v567
        %v569 = vmul.f32 %v360, 1.442695
        %v570 = vpow.pop %v569
        %v571 = vmul.f32 %v361, 1.442695
        %v572 = vpow.pop %v571
        %v573 = vmul.f32 %v362, 1.442695
        %v574 = vpow.pop %v573
        %v575 = vmul.f32 %v363, 1.442695
        %v576 = vpow.pop %v575
        %v577 = vmul.f32 %v364, 1.442695
        %v578 = vpow.pop %v577
        %v579 = vmul.f32 %v365, 1.442695
        %v580 = vpow.pop %v579
        %v581 = vmul.f32 %v366, 1.442695
        %v582 = vpow.pop %v581
        %v583 = vmul.f32 %v367, 1.442695
        %v584 = vpow.pop %v583
        %v585 = vmul.f32 %v368, 1.442695
        %v586 = vpow.pop %v585
        %v587 = vmul.f32 %v369, 1.442695
        %v588 = vpow.pop %v587
        %v589 = vmul.f32 %v370, 1.442695
        %v590 = vpow.pop %v589
        %v591 = vmul.f32 %v371, 1.442695
        %v592 = vpow.pop %v591
        %v593 = vmul.f32 %v372, 1.442695
        %v594 = vpow.pop %v593
        %v595 = vmul.f32 %v373, 1.442695
        %v596 = vpow.pop %v595
        %v597 = vmul.f32 %v374, 1.442695
        %v598 = vpow.pop %v597
        %v599 = vmul.f32 %v375, 1.442695
        %v600 = vpow.pop %v599
        %v601 = vmul.f32 %v376, 1.442695
        %v602 = vpow.pop %v601
        %v603 = vmul.f32 %v377, 1.442695
        %v604 = vpow.pop %v603
        %v605 = vmul.f32 %v378, 1.442695
        %v606 = vpow.pop %v605
        %v607 = vmul.f32 %v379, 1.442695
        %v608 = vpow.pop %v607
        %v609 = vmul.f32 %v380, 1.442695
        %v610 = vpow.pop %v609
        %v611 = vmul.f32 %v381, 1.442695
        %v612 = vpow.pop %v611
        %v613 = vmul.f32 %v382, 1.442695
        %v614 = vpow.pop %v613
        %v615 = vmul.f32 %v383, 1.442695
        %v616 = vpow.pop %v615
        %v617 = vmul.f32 %v384, 1.442695
        %v618 = vpow.pop %v617
        %v619 = vmul.f32 %v385, 1.442695
        %v620 = vpow.pop %v619
        %v621 = vmul.f32 %v386, 1.442695
        %v622 = vpow.pop %v621
        %v623 = vmul.f32 %v387, 1.442695
        %v624 = vpow.pop %v623
        %v625 = vmul.f32 %v388, 1.442695
        %v626 = vpow.pop %v625
        %v627 = vmul.f32 %v389, 1.442695
        %v628 = vpow.pop %v627
        %v629 = vmul.f32 %v390, 1.442695
        %v630 = vpow.pop %v629
        %v631 = vmul.f32 %v391, 1.442695
        %v632 = vpow.pop %v631
        %v633 = vmul.f32 %v392, 1.442695
        %v634 = vpow.pop %v633
        %v635 = vmul.f32 %v393, 1.442695
        %v636 = vpow.pop %v635
        %v637 = vmul.f32 %v394, 1.442695
        %v638 = vpow.pop %v637
        %v639 = vmul.f32 %v395, 1.442695
        %v640 = vpow.pop %v639
        %v641 = vmul.f32 %v396, 1.442695
        %v642 = vpow.pop %v641
        %v643 = vmul.f32 %v397, 1.442695
        %v644 = vpow.pop %v643
        %v645 = vmul.f32 %v398, 1.442695
        %v646 = vpow.pop %v645
        %v647 = vmul.f32 %v399, 1.442695
        %v648 = vpow.pop %v647
        %v649 = vmul.f32 %v400, 1.442695
        %v650 = vpow.pop %v649
        %v651 = vmul.f32 %v401, 1.442695
        %v652 = vpow.pop %v651
        %v653 = vmul.f32 %v402, 1.442695
        %v654 = vpow.pop %v653
        %v655 = vmul.f32 %v403, 1.442695
        %v656 = vpow.pop %v655
        %v657 = vmul.f32 %v404, 1.442695
        %v658 = vpow.pop %v657
        %v659 = vmul.f32 %v405, 1.442695
        %v660 = vpow.pop %v659
        %v661 = vmul.f32 %v406, 1.442695
        %v662 = vpow.pop %v661
        %v663 = vmul.f32 %v407, 1.442695
        %v664 = vpow.pop %v663
        %v665 = vmul.f32 %v408, 1.442695
        %v666 = vpow.pop %v665
        %v667 = vmul.f32 %v409, 1.442695
        %v668 = vpow.pop %v667
        %v669 = vmul.f32 %v410, 1.442695
        %v670 = vpow.pop %v669
        %v671 = vmul.f32 %v411, 1.442695
        %v672 = vpow.pop %v671
        %v673 = vmul.f32 %v412, 1.442695
        %v674 = vpow.pop %v673
        %v675 = vmul.f32 %v413, 1.442695
        %v676 = vpow.pop %v675
        %v677 = vmul.f32 %v414, 1.442695
        %v678 = vpow.pop %v677
        %v679 = vmul.f32 %v415, 1.442695
        %v680 = vpow.pop %v679
        %v681 = vmul.f32 %v416, 1.442695
        %v682 = vpow.pop %v681
        %v683 = vmul.f32 %v417, 1.442695
        %v684 = vpow.pop %v683
        %v685 = vmul.f32 %v418, 1.442695
        %v686 = vpow.pop %v685
        %v687 = vmul.f32 %v419, 1.442695
        %v688 = vpow.pop %v687
        %v689 = vmul.f32 %v420, 1.442695
        %v690 = vpow.pop %v689
        %v691 = vmul.f32 %v421, 1.442695
        %v692 = vpow.pop %v691
        %v693 = vmul.f32 %v422, 1.442695
        %v694 = vpow.pop %v693
        %v695 = vmul.f32 %v423, 1.442695
        %v696 = vpow.pop %v695
        %v697 = vmul.f32 %v424, 1.442695
        %v698 = vpow.pop %v697
        %v699 = vmul.f32 %v425, 1.442695
        %v700 = vpow.pop %v699
        %v701 = vmul.f32 %v426, 1.442695
        %v702 = vpow.pop %v701
        %v703 = vmul.f32 %v427, 1.442695
        %v704 = vpow.pop %v703
        %v705 = vmul.f32 %v428, 1.442695
        %v706 = vpow.pop %v705
        %v707 = vmul.f32 %v429, 1.442695
        %v708 = vpow.pop %v707
        %v709 = vmul.f32 %v430, 1.442695
        %v710 = vpow.pop %v709
        %v711 = vmul.f32 %v431, 1.442695
        %v712 = vpow.pop %v711
        %v713 = vmul.f32 %v432, 1.442695
        %v714 = vpow.pop %v713
        %v715 = vmul.f32 %v433, 1.442695
        %v716 = vpow.pop %v715
        %v717 = vmul.f32 %v434, 1.442695
        %v718 = vpow.pop %v717
        %v719 = vmul.f32 %v435, 1.442695
        %v720 = vpow.pop %v719
        %v721 = vmul.f32 %v436, 1.442695
        %v722 = vpow.pop %v721
        %v723 = vmul.f32 %v437, 1.442695
        %v724 = vpow.pop %v723
        %v725 = vmul.f32 %v438, 1.442695
        %v726 = vpow.pop %v725
        %v727 = vmul.f32 %v439, 1.442695
        %v728 = vpow.pop %v727
        %v729 = vmul.f32 %v440, 1.442695
        %v730 = vpow.pop %v729
        %v731 = vmul.f32 %v441, 1.442695
        %v732 = vpow.pop %v731
        %v733 = vmul.f32 %v442, 1.442695
        %v734 = vpow.pop %v733
        %v735 = vmul.f32 %v443, 1.442695
        %v736 = vpow.pop %v735
        %v737 = vmul.f32 %v444, 1.442695
        %v738 = vpow.pop %v737
        %v739 = vmul.f32 %v445, 1.442695
        %v740 = vpow.pop %v739
        %v741 = vmul.f32 %v446, 1.442695
        %v742 = vpow.pop %v741
        %v743 = vmul.f32 %v447, 1.442695
        %v744 = vpow.pop %v743
        %v745 = vmul.f32 %v448, 1.442695
        %v746 = vpow.pop %v745
        %v747 = vmul.f32 %v449, 1.442695
        %v748 = vpow.pop %v747
        %v749 = vmul.f32 %v450, 1.442695
        %v750 = vpow.pop %v749
        %v751 = vmul.f32 %v451, 1.442695
        %v752 = vpow.pop %v751
        %v753 = vmul.f32 %v452, 1.442695
        %v754 = vpow.pop %v753
        %v755 = vmul.f32 %v453, 1.442695
        %v756 = vpow.pop %v755
        %v757 = vmul.f32 %v454, 1.442695
        %v758 = vpow.pop %v757
        %v759 = vmul.f32 %v455, 1.442695
        %v760 = vpow.pop %v759
        %v761 = vmul.f32 %v456, 1.442695
        %v762 = vpow.pop %v761
        %v763 = vmul.f32 %v457, 1.442695
        %v764 = vpow.pop %v763
        %v765 = vmul.f32 %v458, 1.442695
        %v766 = vpow.pop %v765
        %v767 = vmul.f32 %v459, 1.442695
        %v768 = vpow.pop %v767
        %v769 = vmul.f32 %v460, 1.442695
        %v770 = vpow.pop %v769
        %v771 = vmul.f32 %v461, 1.442695
        %v772 = vpow.pop %v771
        %v773 = vmul.f32 %v462, 1.442695
        %v774 = vpow.pop %v773
        %v775 = vmul.f32 %v463, 1.442695
        %v776 = vpow.pop %v775
        %v777 = vmul.f32 %v464, 1.442695
        %v778 = vpow.pop %v777
        %v779 = vmul.f32 %v465, 1.442695
        %v780 = vpow.pop %v779
        %v781 = vmul.f32 %v466, 1.442695
        %v782 = vpow.pop %v781
        %v783 = vmul.f32 %v467, 1.442695
        %v784 = vpow.pop %v783
        %v785 = vmul.f32 %v468, 1.442695
        %v786 = vpow.pop %v785
        %v787 = vmul.f32 %v469, 1.442695
        %v788 = vpow.pop %v787
        %v789 = vmul.f32 %v470, 1.442695
        %v790 = vpow.pop %v789
        %v791 = vmul.f32 %v471, 1.442695
        %v792 = vpow.pop %v791
        %v793 = vmul.f32 %v472, 1.442695
        %v794 = vpow.pop %v793
        %v795 = vmul.f32 %v473, 1.442695
        %v796 = vpow.pop %v795
        %v797 = vmul.f32 %v474, 1.442695
        %v798 = vpow.pop %v797
        %v799 = vmul.f32 %v475, 1.442695
        %v800 = vpow.pop %v799
        %v801 = vmul.f32 %v476, 1.442695
        %v802 = vpow.pop %v801
        %v803 = vmul.f32 %v477, 1.442695
        %v804 = vpow.pop %v803
        %v805 = vmul.f32 %v478, 1.442695
        %v806 = vpow.pop %v805
        %v807 = vmul.f32 %v479, 1.442695
        %v808 = vpow.pop %v807
        %v809 = vmul.f32 %v480, 1.442695
        %v810 = vpow.pop %v809
        %v811 = vmul.f32 %v481, 1.442695
        %v812 = vpow.pop %v811
        %v813 = vmul.f32 %v482, 1.442695
        %v814 = vpow.pop %v813
        %v815 = vmul.f32 %v483, 1.442695
        %v816 = vpow.pop %v815
        %v817 = vmul.f32 %v484, 1.442695
        %v818 = vpow.pop %v817
        %v819 = vmul.f32 %v485, 1.442695
        %v820 = vpow.pop %v819
        %v821 = vmul.f32 %v486, 1.442695
        %v822 = vpow.pop %v821
        %v823 = vmul.f32 %v487, 1.442695
        %v824 = vpow.pop %v823
        %v825 = vmul.f32 %v488, 1.442695
        %v826 = vpow.pop %v825
        %v827 = vmul.f32 %v489, 1.442695
        %v828 = vpow.pop %v827
        %v829 = vmul.f32 %v490, 1.442695
        %v830 = vpow.pop %v829
        %v831 = vmul.f32 %v491, 1.442695
        %v832 = vpow.pop %v831
        %v833 = vmul.f32 %v492, 1.442695
        %v834 = vpow.pop %v833
        %v835 = vmul.f32 %v493, 1.442695
        %v836 = vpow.pop %v835
        %v837 = vmul.f32 %v494, 1.442695
        %v838 = vpow.pop %v837
        %v839 = vmul.f32 %v495, 1.442695
        %v840 = vpow.pop %v839
        %v841 = vmul.f32 %v496, 1.442695
        %v842 = vpow.pop %v841
        %v843 = vmul.f32 %v497, 1.442695
        %v844 = vpow.pop %v843
        %v845 = vmul.f32 %v498, 1.442695
        %v846 = vpow.pop %v845
        %v847 = vmul.f32 %v499, 1.442695
        %v848 = vpow.pop %v847
        %v849 = vmul.f32 %v500, 1.442695
        %v850 = vpow.pop %v849
        %v851 = vmul.f32 %v501, 1.442695
        %v852 = vpow.pop %v851
        %v853 = vmul.f32 %v502, 1.442695
        %v854 = vpow.pop %v853
        %v855 = vmul.f32 %v503, 1.442695
        %v856 = vpow.pop %v855
        %v857 = vmul.f32 %v504, 1.442695
        %v858 = vpow.pop %v857
        %v859 = vmul.f32 %v505, 1.442695
        %v860 = vpow.pop %v859
        %v861 = vmul.f32 %v506, 1.442695
        %v862 = vpow.pop %v861
        %v863 = vmul.f32 %v507, 1.442695
        %v864 = vpow.pop %v863
        %v865 = vmul.f32 %v508, 1.442695
        %v866 = vpow.pop %v865
        %v867 = vmul.f32 %v509, 1.442695
        %v868 = vpow.pop %v867
        %v869 = vmul.f32 %v510, 1.442695
        %v870 = vpow.pop %v869
        %v871 = vmul.f32 %v511, 1.442695
        %v872 = vpow.pop %v871
        %v873 = vmul.f32 %v512, 1.442695
        %v874 = vpow.pop %v873
        %v875 = vmul.f32 %v513, 1.442695
        %v876 = vpow.pop %v875
        %v877 = vmul.f32 %v514, 1.442695
        %v878 = vpow.pop %v877
        %v879 = vmul.f32 %v515, 1.442695
        %v880 = vpow.pop %v879
        %v881 = vmul.f32 %v516, 1.442695
        %v882 = vpow.pop %v881
        %v883 = vmul.f32 %v517, 1.442695
        %v884 = vpow.pop %v883
        %v885 = vmul.f32 %v518, 1.442695
        %v886 = vpow.pop %v885
        %v887 = vmul.f32 %v519, 1.442695
        %v888 = vpow.pop %v887
        %v889 = vmul.f32 %v520, 1.442695
        %v890 = vpow.pop %v889
        %v891 = vmul.f32 %v521, 1.442695
        %v892 = vpow.pop %v891
        %v893 = vmul.f32 %v522, 1.442695
        %v894 = vpow.pop %v893
        %v895 = vmul.f32 %v523, 1.442695
        %v896 = vpow.pop %v895
        %v897 = vmul.f32 %v524, 1.442695
        %v898 = vpow.pop %v897
        %v899 = vmul.f32 %v525, 1.442695
        %v900 = vpow.pop %v899
        %v901 = vmul.f32 %v526, 1.442695
        %v902 = vpow.pop %v901
        %v903 = vmul.f32 %v527, 1.442695
        %v904 = vpow.pop %v903
        %v905 = vmul.f32 %v528, 1.442695
        %v906 = vpow.pop %v905
        %v907 = vmul.f32 %v529, 1.442695
        %v908 = vpow.pop %v907
        %v909 = vmul.f32 %v530, 1.442695
        %v910 = vpow.pop %v909
        %v911 = vmul.f32 %v531, 1.442695
        %v912 = vpow.pop %v911
        %v913 = vmul.f32 %v532, 1.442695
        %v914 = vpow.pop %v913
        %v915 = vmul.f32 %v533, 1.442695
        %v916 = vpow.pop %v915
        %v917 = vmul.f32 %v534, 1.442695
        %v918 = vpow.pop %v917
        %v919 = vadd.f32 %v536, 1.0
        %v920 = vadd.f32 %v538, 1.0
        %v921 = vadd.f32 %v540, 1.0
        %v922 = vadd.f32 %v542, 1.0
        %v923 = vadd.f32 %v544, 1.0
        %v924 = vadd.f32 %v546, 1.0
        %v925 = vadd.f32 %v548, 1.0
        %v926 = vadd.f32 %v550, 1.0
        %v927 = vadd.f32 %v552, 1.0
        %v928 = vadd.f32 %v554, 1.0
        %v929 = vadd.f32 %v556, 1.0
        %v930 = vadd.f32 %v558, 1.0
        %v931 = vadd.f32 %v560, 1.0
        %v932 = vadd.f32 %v562, 1.0
        %v933 = vadd.f32 %v564, 1.0
        %v934 = vadd.f32 %v566, 1.0
        %v935 = vadd.f32 %v568, 1.0
        %v936 = vadd.f32 %v570, 1.0
        %v937 = vadd.f32 %v572, 1.0
        %v938 = vadd.f32 %v574, 1.0
        %v939 = vadd.f32 %v576, 1.0
        %v940 = vadd.f32 %v578, 1.0
        %v941 = vadd.f32 %v580, 1.0
        %v942 = vadd.f32 %v582, 1.0
        %v943 = vadd.f32 %v584, 1.0
        %v944 = vadd.f32 %v586, 1.0
        %v945 = vadd.f32 %v588, 1.0
        %v946 = vadd.f32 %v590, 1.0
        %v947 = vadd.f32 %v592, 1.0
        %v948 = vadd.f32 %v594, 1.0
        %v949 = vadd.f32 %v596, 1.0
        %v950 = vadd.f32 %v598, 1.0
        %v951 = vadd.f32 %v600, 1.0
        %v952 = vadd.f32 %v602, 1.0
        %v953 = vadd.f32 %v604, 1.0
        %v954 = vadd.f32 %v606, 1.0
        %v955 = vadd.f32 %v608, 1.0
        %v956 = vadd.f32 %v610, 1.0
        %v957 = vadd.f32 %v612, 1.0
        %v958 = vadd.f32 %v614, 1.0
        %v959 = vadd.f32 %v616, 1.0
        %v960 = vadd.f32 %v618, 1.0
        %v961 = vadd.f32 %v620, 1.0
        %v962 = vadd.f32 %v622, 1.0
        %v963 = vadd.f32 %v624, 1.0
        %v964 = vadd.f32 %v626, 1.0
        %v965 = vadd.f32 %v628, 1.0
        %v966 = vadd.f32 %v630, 1.0
        %v967 = vadd.f32 %v632, 1.0
        %v968 = vadd.f32 %v634, 1.0
        %v969 = vadd.f32 %v636, 1.0
        %v970 = vadd.f32 %v638, 1.0
        %v971 = vadd.f32 %v640, 1.0
        %v972 = vadd.f32 %v642, 1.0
        %v973 = vadd.f32 %v644, 1.0
        %v974 = vadd.f32 %v646, 1.0
        %v975 = vadd.f32 %v648, 1.0
        %v976 = vadd.f32 %v650, 1.0
        %v977 = vadd.f32 %v652, 1.0
        %v978 = vadd.f32 %v654, 1.0
        %v979 = vadd.f32 %v656, 1.0
        %v980 = vadd.f32 %v658, 1.0
        %v981 = vadd.f32 %v660, 1.0
        %v982 = vadd.f32 %v662, 1.0
        %v983 = vadd.f32 %v664, 1.0
        %v984 = vadd.f32 %v666, 1.0
        %v985 = vadd.f32 %v668, 1.0
        %v986 = vadd.f32 %v670, 1.0
        %v987 = vadd.f32 %v672, 1.0
        %v988 = vadd.f32 %v674, 1.0
        %v989 = vadd.f32 %v676, 1.0
        %v990 = vadd.f32 %v678, 1.0
        %v991 = vadd.f32 %v680, 1.0
        %v992 = vadd.f32 %v682, 1.0
        %v993 = vadd.f32 %v684, 1.0
        %v994 = vadd.f32 %v686, 1.0
        %v995 = vadd.f32 %v688, 1.0
        %v996 = vadd.f32 %v690, 1.0
        %v997 = vadd.f32 %v692, 1.0
        %v998 = vadd.f32 %v694, 1.0
        %v999 = vadd.f32 %v696, 1.0
        %v1000 = vadd.f32 %v698, 1.0
        %v1001 = vadd.f32 %v700, 1.0
        %v1002 = vadd.f32 %v702, 1.0
        %v1003 = vadd.f32 %v704, 1.0
        %v1004 = vadd.f32 %v706, 1.0
        %v1005 = vadd.f32 %v708, 1.0
        %v1006 = vadd.f32 %v710, 1.0
        %v1007 = vadd.f32 %v712, 1.0
        %v1008 = vadd.f32 %v714, 1.0
        %v1009 = vadd.f32 %v716, 1.0
        %v1010 = vadd.f32 %v718, 1.0
        %v1011 = vadd.f32 %v720, 1.0
        %v1012 = vadd.f32 %v722, 1.0
        %v1013 = vadd.f32 %v724, 1.0
        %v1014 = vadd.f32 %v726, 1.0
        %v1015 = vadd.f32 %v728, 1.0
        %v1016 = vadd.f32 %v730, 1.0
        %v1017 = vadd.f32 %v732, 1.0
        %v1018 = vadd.f32 %v734, 1.0
        %v1019 = vadd.f32 %v736, 1.0
        %v1020 = vadd.f32 %v738, 1.0
        %v1021 = vadd.f32 %v740, 1.0
        %v1022 = vadd.f32 %v742, 1.0
        %v1023 = vadd.f32 %v744, 1.0
        %v1024 = vadd.f32 %v746, 1.0
        %v1025 = vadd.f32 %v748, 1.0
        %v1026 = vadd.f32 %v750, 1.0
        %v1027 = vadd.f32 %v752, 1.0
        %v1028 = vadd.f32 %v754, 1.0
        %v1029 = vadd.f32 %v756, 1.0
        %v1030 = vadd.f32 %v758, 1.0
        %v1031 = vadd.f32 %v760, 1.0
        %v1032 = vadd.f32 %v762, 1.0
        %v1033 = vadd.f32 %v764, 1.0
        %v1034 = vadd.f32 %v766, 1.0
        %v1035 = vadd.f32 %v768, 1.0
        %v1036 = vadd.f32 %v770, 1.0
        %v1037 = vadd.f32 %v772, 1.0
        %v1038 = vadd.f32 %v774, 1.0
        %v1039 = vadd.f32 %v776, 1.0
        %v1040 = vadd.f32 %v778, 1.0
        %v1041 = vadd.f32 %v780, 1.0
        %v1042 = vadd.f32 %v782, 1.0
        %v1043 = vadd.f32 %v784, 1.0
        %v1044 = vadd.f32 %v786, 1.0
        %v1045 = vadd.f32 %v788, 1.0
        %v1046 = vadd.f32 %v790, 1.0
        %v1047 = vadd.f32 %v792, 1.0
        %v1048 = vadd.f32 %v794, 1.0
        %v1049 = vadd.f32 %v796, 1.0
        %v1050 = vadd.f32 %v798, 1.0
        %v1051 = vadd.f32 %v800, 1.0
        %v1052 = vadd.f32 %v802, 1.0
        %v1053 = vadd.f32 %v804, 1.0
        %v1054 = vadd.f32 %v806, 1.0
        %v1055 = vadd.f32 %v808, 1.0
        %v1056 = vadd.f32 %v810, 1.0
        %v1057 = vadd.f32 %v812, 1.0
        %v1058 = vadd.f32 %v814, 1.0
        %v1059 = vadd.f32 %v816, 1.0
        %v1060 = vadd.f32 %v818, 1.0
        %v1061 = vadd.f32 %v820, 1.0
        %v1062 = vadd.f32 %v822, 1.0
        %v1063 = vadd.f32 %v824, 1.0
        %v1064 = vadd.f32 %v826, 1.0
        %v1065 = vadd.f32 %v828, 1.0
        %v1066 = vadd.f32 %v830, 1.0
        %v1067 = vadd.f32 %v832, 1.0
        %v1068 = vadd.f32 %v834, 1.0
        %v1069 = vadd.f32 %v836, 1.0
        %v1070 = vadd.f32 %v838, 1.0
        %v1071 = vadd.f32 %v840, 1.0
        %v1072 = vadd.f32 %v842, 1.0
        %v1073 = vadd.f32 %v844, 1.0
        %v1074 = vadd.f32 %v846, 1.0
        %v1075 = vadd.f32 %v848, 1.0
        %v1076 = vadd.f32 %v850, 1.0
        %v1077 = vadd.f32 %v852, 1.0
        %v1078 = vadd.f32 %v854, 1.0
        %v1079 = vadd.f32 %v856, 1.0
        %v1080 = vadd.f32 %v858, 1.0
        %v1081 = vadd.f32 %v860, 1.0
        %v1082 = vadd.f32 %v862, 1.0
        %v1083 = vadd.f32 %v864, 1.0
        %v1084 = vadd.f32 %v866, 1.0
        %v1085 = vadd.f32 %v868, 1.0
        %v1086 = vadd.f32 %v870, 1.0
        %v1087 = vadd.f32 %v872, 1.0
        %v1088 = vadd.f32 %v874, 1.0
        %v1089 = vadd.f32 %v876, 1.0
        %v1090 = vadd.f32 %v878, 1.0
        %v1091 = vadd.f32 %v880, 1.0
        %v1092 = vadd.f32 %v882, 1.0
        %v1093 = vadd.f32 %v884, 1.0
        %v1094 = vadd.f32 %v886, 1.0
        %v1095 = vadd.f32 %v888, 1.0
        %v1096 = vadd.f32 %v890, 1.0
        %v1097 = vadd.f32 %v892, 1.0
        %v1098 = vadd.f32 %v894, 1.0
        %v1099 = vadd.f32 %v896, 1.0
        %v1100 = vadd.f32 %v898, 1.0
        %v1101 = vadd.f32 %v900, 1.0
        %v1102 = vadd.f32 %v902, 1.0
        %v1103 = vadd.f32 %v904, 1.0
        %v1104 = vadd.f32 %v906, 1.0
        %v1105 = vadd.f32 %v908, 1.0
        %v1106 = vadd.f32 %v910, 1.0
        %v1107 = vadd.f32 %v912, 1.0
        %v1108 = vadd.f32 %v914, 1.0
        %v1109 = vadd.f32 %v916, 1.0
        %v1110 = vadd.f32 %v918, 1.0
        %v1111 = vrcp.pop %v919
        %v1112 = vmul.f32 1.0, %v1111
        %v1113 = vrcp.pop %v920
        %v1114 = vmul.f32 1.0, %v1113
        %v1115 = vrcp.pop %v921
        %v1116 = vmul.f32 1.0, %v1115
        %v1117 = vrcp.pop %v922
        %v1118 = vmul.f32 1.0, %v1117
        %v1119 = vrcp.pop %v923
        %v1120 = vmul.f32 1.0, %v1119
        %v1121 = vrcp.pop %v924
        %v1122 = vmul.f32 1.0, %v1121
        %v1123 = vrcp.pop %v925
        %v1124 = vmul.f32 1.0, %v1123
        %v1125 = vrcp.pop %v926
        %v1126 = vmul.f32 1.0, %v1125
        %v1127 = vrcp.pop %v927
        %v1128 = vmul.f32 1.0, %v1127
        %v1129 = vrcp.pop %v928
        %v1130 = vmul.f32 1.0, %v1129
        %v1131 = vrcp.pop %v929
        %v1132 = vmul.f32 1.0, %v1131
        %v1133 = vrcp.pop %v930
        %v1134 = vmul.f32 1.0, %v1133
        %v1135 = vrcp.pop %v931
        %v1136 = vmul.f32 1.0, %v1135
        %v1137 = vrcp.pop %v932
        %v1138 = vmul.f32 1.0, %v1137
        %v1139 = vrcp.pop %v933
        %v1140 = vmul.f32 1.0, %v1139
        %v1141 = vrcp.pop %v934
        %v1142 = vmul.f32 1.0, %v1141
        %v1143 = vrcp.pop %v935
        %v1144 = vmul.f32 1.0, %v1143
        %v1145 = vrcp.pop %v936
        %v1146 = vmul.f32 1.0, %v1145
        %v1147 = vrcp.pop %v937
        %v1148 = vmul.f32 1.0, %v1147
        %v1149 = vrcp.pop %v938
        %v1150 = vmul.f32 1.0, %v1149
        %v1151 = vrcp.pop %v939
        %v1152 = vmul.f32 1.0, %v1151
        %v1153 = vrcp.pop %v940
        %v1154 = vmul.f32 1.0, %v1153
        %v1155 = vrcp.pop %v941
        %v1156 = vmul.f32 1.0, %v1155
        %v1157 = vrcp.pop %v942
        %v1158 = vmul.f32 1.0, %v1157
        %v1159 = vrcp.pop %v943
        %v1160 = vmul.f32 1.0, %v1159
        %v1161 = vrcp.pop %v944
        %v1162 = vmul.f32 1.0, %v1161
        %v1163 = vrcp.pop %v945
        %v1164 = vmul.f32 1.0, %v1163
        %v1165 = vrcp.pop %v946
        %v1166 = vmul.f32 1.0, %v1165
        %v1167 = vrcp.pop %v947
        %v1168 = vmul.f32 1.0, %v1167
        %v1169 = vrcp.pop %v948
        %v1170 = vmul.f32 1.0, %v1169
        %v1171 = vrcp.pop %v949
        %v1172 = vmul.f32 1.0, %v1171
        %v1173 = vrcp.pop %v950
        %v1174 = vmul.f32 1.0, %v1173
        %v1175 = vrcp.pop %v951
        %v1176 = vmul.f32 1.0, %v1175
        %v1177 = vrcp.pop %v952
        %v1178 = vmul.f32 1.0, %v1177
        %v1179 = vrcp.pop %v953
        %v1180 = vmul.f32 1.0, %v1179
        %v1181 = vrcp.pop %v954
        %v1182 = vmul.f32 1.0, %v1181
        %v1183 = vrcp.pop %v955
        %v1184 = vmul.f32 1.0, %v1183
        %v1185 = vrcp.pop %v956
        %v1186 = vmul.f32 1.0, %v1185
        %v1187 = vrcp.pop %v957
        %v1188 = vmul.f32 1.0, %v1187
        %v1189 = vrcp.pop %v958
        %v1190 = vmul.f32 1.0, %v1189
        %v1191 = vrcp.pop %v959
        %v1192 = vmul.f32 1.0, %v1191
        %v1193 = vrcp.pop %v960
        %v1194 = vmul.f32 1.0, %v1193
        %v1195 = vrcp.pop %v961
        %v1196 = vmul.f32 1.0, %v1195
        %v1197 = vrcp.pop %v962
        %v1198 = vmul.f32 1.0, %v1197
        %v1199 = vrcp.pop %v963
        %v1200 = vmul.f32 1.0, %v1199
        %v1201 = vrcp.pop %v964
        %v1202 = vmul.f32 1.0, %v1201
        %v1203 = vrcp.pop %v965
        %v1204 = vmul.f32 1.0, %v1203
        %v1205 = vrcp.pop %v966
        %v1206 = vmul.f32 1.0, %v1205
        %v1207 = vrcp.pop %v967
        %v1208 = vmul.f32 1.0, %v1207
        %v1209 = vrcp.pop %v968
        %v1210 = vmul.f32 1.0, %v1209
        %v1211 = vrcp.pop %v969
        %v1212 = vmul.f32 1.0, %v1211
        %v1213 = vrcp.pop %v970
        %v1214 = vmul.f32 1.0, %v1213
        %v1215 = vrcp.pop %v971
        %v1216 = vmul.f32 1.0, %v1215
        %v1217 = vrcp.pop %v972
        %v1218 = vmul.f32 1.0, %v1217
        %v1219 = vrcp.pop %v973
        %v1220 = vmul.f32 1.0, %v1219
        %v1221 = vrcp.pop %v974
        %v1222 = vmul.f32 1.0, %v1221
        %v1223 = vrcp.pop %v975
        %v1224 = vmul.f32 1.0, %v1223
        %v1225 = vrcp.pop %v976
        %v1226 = vmul.f32 1.0, %v1225
        %v1227 = vrcp.pop %v977
        %v1228 = vmul.f32 1.0, %v1227
        %v1229 = vrcp.pop %v978
        %v1230 = vmul.f32 1.0, %v1229
        %v1231 = vrcp.pop %v979
        %v1232 = vmul.f32 1.0, %v1231
        %v1233 = vrcp.pop %v980
        %v1234 = vmul.f32 1.0, %v1233
        %v1235 = vrcp.pop %v981
        %v1236 = vmul.f32 1.0, %v1235
        %v1237 = vrcp.pop %v982
        %v1238 = vmul.f32 1.0, %v1237
        %v1239 = vrcp.pop %v983
        %v1240 = vmul.f32 1.0, %v1239
        %v1241 = vrcp.pop %v984
        %v1242 = vmul.f32 1.0, %v1241
        %v1243 = vrcp.pop %v985
        %v1244 = vmul.f32 1.0, %v1243
        %v1245 = vrcp.pop %v986
        %v1246 = vmul.f32 1.0, %v1245
        %v1247 = vrcp.pop %v987
        %v1248 = vmul.f32 1.0, %v1247
        %v1249 = vrcp.pop %v988
        %v1250 = vmul.f32 1.0, %v1249
        %v1251 = vrcp.pop %v989
        %v1252 = vmul.f32 1.0, %v1251
        %v1253 = vrcp.pop %v990
        %v1254 = vmul.f32 1.0, %v1253
        %v1255 = vrcp.pop %v991
        %v1256 = vmul.f32 1.0, %v1255
        %v1257 = vrcp.pop %v992
        %v1258 = vmul.f32 1.0, %v1257
        %v1259 = vrcp.pop %v993
        %v1260 = vmul.f32 1.0, %v1259
        %v1261 = vrcp.pop %v994
        %v1262 = vmul.f32 1.0, %v1261
        %v1263 = vrcp.pop %v995
        %v1264 = vmul.f32 1.0, %v1263
        %v1265 = vrcp.pop %v996
        %v1266 = vmul.f32 1.0, %v1265
        %v1267 = vrcp.pop %v997
        %v1268 = vmul.f32 1.0, %v1267
        %v1269 = vrcp.pop %v998
        %v1270 = vmul.f32 1.0, %v1269
        %v1271 = vrcp.pop %v999
        %v1272 = vmul.f32 1.0, %v1271
        %v1273 = vrcp.pop %v1000
        %v1274 = vmul.f32 1.0, %v1273
        %v1275 = vrcp.pop %v1001
        %v1276 = vmul.f32 1.0, %v1275
        %v1277 = vrcp.pop %v1002
        %v1278 = vmul.f32 1.0, %v1277
        %v1279 = vrcp.pop %v1003
        %v1280 = vmul.f32 1.0, %v1279
        %v1281 = vrcp.pop %v1004
        %v1282 = vmul.f32 1.0, %v1281
        %v1283 = vrcp.pop %v1005
        %v1284 = vmul.f32 1.0, %v1283
        %v1285 = vrcp.pop %v1006
        %v1286 = vmul.f32 1.0, %v1285
        %v1287 = vrcp.pop %v1007
        %v1288 = vmul.f32 1.0, %v1287
        %v1289 = vrcp.pop %v1008
        %v1290 = vmul.f32 1.0, %v1289
        %v1291 = vrcp.pop %v1009
        %v1292 = vmul.f32 1.0, %v1291
        %v1293 = vrcp.pop %v1010
        %v1294 = vmul.f32 1.0, %v1293
        %v1295 = vrcp.pop %v1011
        %v1296 = vmul.f32 1.0, %v1295
        %v1297 = vrcp.pop %v1012
        %v1298 = vmul.f32 1.0, %v1297
        %v1299 = vrcp.pop %v1013
        %v1300 = vmul.f32 1.0, %v1299
        %v1301 = vrcp.pop %v1014
        %v1302 = vmul.f32 1.0, %v1301
        %v1303 = vrcp.pop %v1015
        %v1304 = vmul.f32 1.0, %v1303
        %v1305 = vrcp.pop %v1016
        %v1306 = vmul.f32 1.0, %v1305
        %v1307 = vrcp.pop %v1017
        %v1308 = vmul.f32 1.0, %v1307
        %v1309 = vrcp.pop %v1018
        %v1310 = vmul.f32 1.0, %v1309
        %v1311 = vrcp.pop %v1019
        %v1312 = vmul.f32 1.0, %v1311
        %v1313 = vrcp.pop %v1020
        %v1314 = vmul.f32 1.0, %v1313
        %v1315 = vrcp.pop %v1021
        %v1316 = vmul.f32 1.0, %v1315
        %v1317 = vrcp.pop %v1022
        %v1318 = vmul.f32 1.0, %v1317
        %v1319 = vrcp.pop %v1023
        %v1320 = vmul.f32 1.0, %v1319
        %v1321 = vrcp.pop %v1024
        %v1322 = vmul.f32 1.0, %v1321
        %v1323 = vrcp.pop %v1025
        %v1324 = vmul.f32 1.0, %v1323
        %v1325 = vrcp.pop %v1026
        %v1326 = vmul.f32 1.0, %v1325
        %v1327 = vrcp.pop %v1027
        %v1328 = vmul.f32 1.0, %v1327
        %v1329 = vrcp.pop %v1028
        %v1330 = vmul.f32 1.0, %v1329
        %v1331 = vrcp.pop %v1029
        %v1332 = vmul.f32 1.0, %v1331
        %v1333 = vrcp.pop %v1030
        %v1334 = vmul.f32 1.0, %v1333
        %v1335 = vrcp.pop %v1031
        %v1336 = vmul.f32 1.0, %v1335
        %v1337 = vrcp.pop %v1032
        %v1338 = vmul.f32 1.0, %v1337
        %v1339 = vrcp.pop %v1033
        %v1340 = vmul.f32 1.0, %v1339
        %v1341 = vrcp.pop %v1034
        %v1342 = vmul.f32 1.0, %v1341
        %v1343 = vrcp.pop %v1035
        %v1344 = vmul.f32 1.0, %v1343
        %v1345 = vrcp.pop %v1036
        %v1346 = vmul.f32 1.0, %v1345
        %v1347 = vrcp.pop %v1037
        %v1348 = vmul.f32 1.0, %v1347
        %v1349 = vrcp.pop %v1038
        %v1350 = vmul.f32 1.0, %v1349
        %v1351 = vrcp.pop %v1039
        %v1352 = vmul.f32 1.0, %v1351
        %v1353 = vrcp.pop %v1040
        %v1354 = vmul.f32 1.0, %v1353
        %v1355 = vrcp.pop %v1041
        %v1356 = vmul.f32 1.0, %v1355
        %v1357 = vrcp.pop %v1042
        %v1358 = vmul.f32 1.0, %v1357
        %v1359 = vrcp.pop %v1043
        %v1360 = vmul.f32 1.0, %v1359
        %v1361 = vrcp.pop %v1044
        %v1362 = vmul.f32 1.0, %v1361
        %v1363 = vrcp.pop %v1045
        %v1364 = vmul.f32 1.0, %v1363
        %v1365 = vrcp.pop %v1046
        %v1366 = vmul.f32 1.0, %v1365
        %v1367 = vrcp.pop %v1047
        %v1368 = vmul.f32 1.0, %v1367
        %v1369 = vrcp.pop %v1048
        %v1370 = vmul.f32 1.0, %v1369
        %v1371 = vrcp.pop %v1049
        %v1372 = vmul.f32 1.0, %v1371
        %v1373 = vrcp.pop %v1050
        %v1374 = vmul.f32 1.0, %v1373
        %v1375 = vrcp.pop %v1051
        %v1376 = vmul.f32 1.0, %v1375
        %v1377 = vrcp.pop %v1052
        %v1378 = vmul.f32 1.0, %v1377
        %v1379 = vrcp.pop %v1053
        %v1380 = vmul.f32 1.0, %v1379
        %v1381 = vrcp.pop %v1054
        %v1382 = vmul.f32 1.0, %v1381
        %v1383 = vrcp.pop %v1055
        %v1384 = vmul.f32 1.0, %v1383
        %v1385 = vrcp.pop %v1056
        %v1386 = vmul.f32 1.0, %v1385
        %v1387 = vrcp.pop %v1057
        %v1388 = vmul.f32 1.0, %v1387
        %v1389 = vrcp.pop %v1058
        %v1390 = vmul.f32 1.0, %v1389
        %v1391 = vrcp.pop %v1059
        %v1392 = vmul.f32 1.0, %v1391
        %v1393 = vrcp.pop %v1060
        %v1394 = vmul.f32 1.0, %v1393
        %v1395 = vrcp.pop %v1061
        %v1396 = vmul.f32 1.0, %v1395
        %v1397 = vrcp.pop %v1062
        %v1398 = vmul.f32 1.0, %v1397
        %v1399 = vrcp.pop %v1063
        %v1400 = vmul.f32 1.0, %v1399
        %v1401 = vrcp.pop %v1064
        %v1402 = vmul.f32 1.0, %v1401
        %v1403 = vrcp.pop %v1065
        %v1404 = vmul.f32 1.0, %v1403
        %v1405 = vrcp.pop %v1066
        %v1406 = vmul.f32 1.0, %v1405
        %v1407 = vrcp.pop %v1067
        %v1408 = vmul.f32 1.0, %v1407
        %v1409 = vrcp.pop %v1068
        %v1410 = vmul.f32 1.0, %v1409
        %v1411 = vrcp.pop %v1069
        %v1412 = vmul.f32 1.0, %v1411
        %v1413 = vrcp.pop %v1070
        %v1414 = vmul.f32 1.0, %v1413
        %v1415 = vrcp.pop %v1071
        %v1416 = vmul.f32 1.0, %v1415
        %v1417 = vrcp.pop %v1072
        %v1418 = vmul.f32 1.0, %v1417
        %v1419 = vrcp.pop %v1073
        %v1420 = vmul.f32 1.0, %v1419
        %v1421 = vrcp.pop %v1074
        %v1422 = vmul.f32 1.0, %v1421
        %v1423 = vrcp.pop %v1075
        %v1424 = vmul.f32 1.0, %v1423
        %v1425 = vrcp.pop %v1076
        %v1426 = vmul.f32 1.0, %v1425
        %v1427 = vrcp.pop %v1077
        %v1428 = vmul.f32 1.0, %v1427
        %v1429 = vrcp.pop %v1078
        %v1430 = vmul.f32 1.0, %v1429
        %v1431 = vrcp.pop %v1079
        %v1432 = vmul.f32 1.0, %v1431
        %v1433 = vrcp.pop %v1080
        %v1434 = vmul.f32 1.0, %v1433
        %v1435 = vrcp.pop %v1081
        %v1436 = vmul.f32 1.0, %v1435
        %v1437 = vrcp.pop %v1082
        %v1438 = vmul.f32 1.0, %v1437
        %v1439 = vrcp.pop %v1083
        %v1440 = vmul.f32 1.0, %v1439
        %v1441 = vrcp.pop %v1084
        %v1442 = vmul.f32 1.0, %v1441
        %v1443 = vrcp.pop %v1085
        %v1444 = vmul.f32 1.0, %v1443
        %v1445 = vrcp.pop %v1086
        %v1446 = vmul.f32 1.0, %v1445
        %v1447 = vrcp.pop %v1087
        %v1448 = vmul.f32 1.0, %v1447
        %v1449 = vrcp.pop %v1088
        %v1450 = vmul.f32 1.0, %v1449
        %v1451 = vrcp.pop %v1089
        %v1452 = vmul.f32 1.0, %v1451
        %v1453 = vrcp.pop %v1090
        %v1454 = vmul.f32 1.0, %v1453
        %v1455 = vrcp.pop %v1091
        %v1456 = vmul.f32 1.0, %v1455
        %v1457 = vrcp.pop %v1092
        %v1458 = vmul.f32 1.0, %v1457
        %v1459 = vrcp.pop %v1093
        %v1460 = vmul.f32 1.0, %v1459
        %v1461 = vrcp.pop %v1094
        %v1462 = vmul.f32 1.0, %v1461
        %v1463 = vrcp.pop %v1095
        %v1464 = vmul.f32 1.0, %v1463
        %v1465 = vrcp.pop %v1096
        %v1466 = vmul.f32 1.0, %v1465
        %v1467 = vrcp.pop %v1097
        %v1468 = vmul.f32 1.0, %v1467
        %v1469 = vrcp.pop %v1098
        %v1470 = vmul.f32 1.0, %v1469
        %v1471 = vrcp.pop %v1099
        %v1472 = vmul.f32 1.0, %v1471
        %v1473 = vrcp.pop %v1100
        %v1474 = vmul.f32 1.0, %v1473
        %v1475 = vrcp.pop %v1101
        %v1476 = vmul.f32 1.0, %v1475
        %v1477 = vrcp.pop %v1102
        %v1478 = vmul.f32 1.0, %v1477
        %v1479 = vrcp.pop %v1103
        %v1480 = vmul.f32 1.0, %v1479
        %v1481 = vrcp.pop %v1104
        %v1482 = vmul.f32 1.0, %v1481
        %v1483 = vrcp.pop %v1105
        %v1484 = vmul.f32 1.0, %v1483
        %v1485 = vrcp.pop %v1106
        %v1486 = vmul.f32 1.0, %v1485
        %v1487 = vrcp.pop %v1107
        %v1488 = vmul.f32 1.0, %v1487
        %v1489 = vrcp.pop %v1108
        %v1490 = vmul.f32 1.0, %v1489
        %v1491 = vrcp.pop %v1109
        %v1492 = vmul.f32 1.0, %v1491
        %v1493 = vrcp.pop %v1110
        %v1494 = vmul.f32 1.0, %v1493
        %1495 = vst [vmem:[%s140] sm:$0xff] %v1112
        %1496 = vst [vmem:[%s140 + $0x8] sm:$0xff] %v1114
        %1497 = vst [vmem:[%s140 + $0x10] sm:$0xff] %v1116
        %1498 = vst [vmem:[%s140 + $0x18] sm:$0xff] %v1118
        %1499 = vst [vmem:[%s140 + $0x20] sm:$0xff] %v1120
        %1500 = vst [vmem:[%s140 + $0x28] sm:$0xff] %v1122
        %1501 = vst [vmem:[%s140 + $0x30] sm:$0xff] %v1124
        %1502 = vst [vmem:[%s140 + $0x38] sm:$0xff] %v1126
        %1503 = vst [vmem:[%s140 + $0x40] sm:$0xff] %v1128
        %1504 = vst [vmem:[%s140 + $0x48] sm:$0xff] %v1130
        %1505 = vst [vmem:[%s140 + $0x50] sm:$0xff] %v1132
        %1506 = vst [vmem:[%s140 + $0x58] sm:$0xff] %v1134
        %1507 = vst [vmem:[%s140 + $0x60] sm:$0xff] %v1136
        %1508 = vst [vmem:[%s140 + $0x68] sm:$0xff] %v1138
        %1509 = vst [vmem:[%s140 + $0x70] sm:$0xff] %v1140
        %1510 = vst [vmem:[%s140 + $0x78] sm:$0xff] %v1142
        %1511 = vst [vmem:[%s140 + $0x80] sm:$0xff] %v1144
        %1512 = vst [vmem:[%s140 + $0x88] sm:$0xff] %v1146
        %1513 = vst [vmem:[%s140 + $0x90] sm:$0xff] %v1148
        %1514 = vst [vmem:[%s140 + $0x98] sm:$0xff] %v1150
        %1515 = vst [vmem:[%s140 + $0xa0] sm:$0xff] %v1152
        %1516 = vst [vmem:[%s140 + $0xa8] sm:$0xff] %v1154
        %1517 = vst [vmem:[%s140 + $0xb0] sm:$0xff] %v1156
        %1518 = vst [vmem:[%s140 + $0xb8] sm:$0xff] %v1158
        %1519 = vst [vmem:[%s140 + $0xc0] sm:$0xff] %v1160
        %1520 = vst [vmem:[%s140 + $0xc8] sm:$0xff] %v1162
        %1521 = vst [vmem:[%s140 + $0xd0] sm:$0xff] %v1164
        %1522 = vst [vmem:[%s140 + $0xd8] sm:$0xff] %v1166
        %1523 = vst [vmem:[%s140 + $0xe0] sm:$0xff] %v1168
        %1524 = vst [vmem:[%s140 + $0xe8] sm:$0xff] %v1170
        %1525 = vst [vmem:[%s140 + $0xf0] sm:$0xff] %v1172
        %1526 = vst [vmem:[%s140 + $0xf8] sm:$0xff] %v1174
        %1527 = vst [vmem:[%s140 + $0x100] sm:$0xff] %v1176
        %1528 = vst [vmem:[%s140 + $0x108] sm:$0xff] %v1178
        %1529 = vst [vmem:[%s140 + $0x110] sm:$0xff] %v1180
        %1530 = vst [vmem:[%s140 + $0x118] sm:$0xff] %v1182
        %1531 = vst [vmem:[%s140 + $0x120] sm:$0xff] %v1184
        %1532 = vst [vmem:[%s140 + $0x128] sm:$0xff] %v1186
        %1533 = vst [vmem:[%s140 + $0x130] sm:$0xff] %v1188
        %1534 = vst [vmem:[%s140 + $0x138] sm:$0xff] %v1190
        %1535 = vst [vmem:[%s140 + $0x140] sm:$0xff] %v1192
        %1536 = vst [vmem:[%s140 + $0x148] sm:$0xff] %v1194
        %1537 = vst [vmem:[%s140 + $0x150] sm:$0xff] %v1196
        %1538 = vst [vmem:[%s140 + $0x158] sm:$0xff] %v1198
        %1539 = vst [vmem:[%s140 + $0x160] sm:$0xff] %v1200
        %1540 = vst [vmem:[%s140 + $0x168] sm:$0xff] %v1202
        %1541 = vst [vmem:[%s140 + $0x170] sm:$0xff] %v1204
        %1542 = vst [vmem:[%s140 + $0x178] sm:$0xff] %v1206
        %1543 = vst [vmem:[%s140 + $0x180] sm:$0xff] %v1208
        %1544 = vst [vmem:[%s140 + $0x188] sm:$0xff] %v1210
        %1545 = vst [vmem:[%s140 + $0x190] sm:$0xff] %v1212
        %1546 = vst [vmem:[%s140 + $0x198] sm:$0xff] %v1214
        %1547 = vst [vmem:[%s140 + $0x1a0] sm:$0xff] %v1216
        %1548 = vst [vmem:[%s140 + $0x1a8] sm:$0xff] %v1218
        %1549 = vst [vmem:[%s140 + $0x1b0] sm:$0xff] %v1220
        %1550 = vst [vmem:[%s140 + $0x1b8] sm:$0xff] %v1222
        %1551 = vst [vmem:[%s140 + $0x1c0] sm:$0xff] %v1224
        %1552 = vst [vmem:[%s140 + $0x1c8] sm:$0xff] %v1226
        %1553 = vst [vmem:[%s140 + $0x1d0] sm:$0xff] %v1228
        %1554 = vst [vmem:[%s140 + $0x1d8] sm:$0xff] %v1230
        %1555 = vst [vmem:[%s140 + $0x1e0] sm:$0xff] %v1232
        %1556 = vst [vmem:[%s140 + $0x1e8] sm:$0xff] %v1234
        %1557 = vst [vmem:[%s140 + $0x1f0] sm:$0xff] %v1236
        %1558 = vst [vmem:[%s140 + $0x1f8] sm:$0xff] %v1238
        %1559 = vst [vmem:[%s140 + $0x200] sm:$0xff] %v1240
        %1560 = vst [vmem:[%s140 + $0x208] sm:$0xff] %v1242
        %1561 = vst [vmem:[%s140 + $0x210] sm:$0xff] %v1244
        %1562 = vst [vmem:[%s140 + $0x218] sm:$0xff] %v1246
        %1563 = vst [vmem:[%s140 + $0x220] sm:$0xff] %v1248
        %1564 = vst [vmem:[%s140 + $0x228] sm:$0xff] %v1250
        %1565 = vst [vmem:[%s140 + $0x230] sm:$0xff] %v1252
        %1566 = vst [vmem:[%s140 + $0x238] sm:$0xff] %v1254
        %1567 = vst [vmem:[%s140 + $0x240] sm:$0xff] %v1256
        %1568 = vst [vmem:[%s140 + $0x248] sm:$0xff] %v1258
        %1569 = vst [vmem:[%s140 + $0x250] sm:$0xff] %v1260
        %1570 = vst [vmem:[%s140 + $0x258] sm:$0xff] %v1262
        %1571 = vst [vmem:[%s140 + $0x260] sm:$0xff] %v1264
        %1572 = vst [vmem:[%s140 + $0x268] sm:$0xff] %v1266
        %1573 = vst [vmem:[%s140 + $0x270] sm:$0xff] %v1268
        %1574 = vst [vmem:[%s140 + $0x278] sm:$0xff] %v1270
        %1575 = vst [vmem:[%s140 + $0x280] sm:$0xff] %v1272
        %1576 = vst [vmem:[%s140 + $0x288] sm:$0xff] %v1274
        %1577 = vst [vmem:[%s140 + $0x290] sm:$0xff] %v1276
        %1578 = vst [vmem:[%s140 + $0x298] sm:$0xff] %v1278
        %1579 = vst [vmem:[%s140 + $0x2a0] sm:$0xff] %v1280
        %1580 = vst [vmem:[%s140 + $0x2a8] sm:$0xff] %v1282
        %1581 = vst [vmem:[%s140 + $0x2b0] sm:$0xff] %v1284
        %1582 = vst [vmem:[%s140 + $0x2b8] sm:$0xff] %v1286
        %1583 = vst [vmem:[%s140 + $0x2c0] sm:$0xff] %v1288
        %1584 = vst [vmem:[%s140 + $0x2c8] sm:$0xff] %v1290
        %1585 = vst [vmem:[%s140 + $0x2d0] sm:$0xff] %v1292
        %1586 = vst [vmem:[%s140 + $0x2d8] sm:$0xff] %v1294
        %1587 = vst [vmem:[%s140 + $0x2e0] sm:$0xff] %v1296
        %1588 = vst [vmem:[%s140 + $0x2e8] sm:$0xff] %v1298
        %1589 = vst [vmem:[%s140 + $0x2f0] sm:$0xff] %v1300
        %1590 = vst [vmem:[%s140 + $0x2f8] sm:$0xff] %v1302
        %1591 = vst [vmem:[%s140 + $0x300] sm:$0xff] %v1304
        %1592 = vst [vmem:[%s140 + $0x308] sm:$0xff] %v1306
        %1593 = vst [vmem:[%s140 + $0x310] sm:$0xff] %v1308
        %1594 = vst [vmem:[%s140 + $0x318] sm:$0xff] %v1310
        %1595 = vst [vmem:[%s140 + $0x320] sm:$0xff] %v1312
        %1596 = vst [vmem:[%s140 + $0x328] sm:$0xff] %v1314
        %1597 = vst [vmem:[%s140 + $0x330] sm:$0xff] %v1316
        %1598 = vst [vmem:[%s140 + $0x338] sm:$0xff] %v1318
        %1599 = vst [vmem:[%s140 + $0x340] sm:$0xff] %v1320
        %1600 = vst [vmem:[%s140 + $0x348] sm:$0xff] %v1322
        %1601 = vst [vmem:[%s140 + $0x350] sm:$0xff] %v1324
        %1602 = vst [vmem:[%s140 + $0x358] sm:$0xff] %v1326
        %1603 = vst [vmem:[%s140 + $0x360] sm:$0xff] %v1328
        %1604 = vst [vmem:[%s140 + $0x368] sm:$0xff] %v1330
        %1605 = vst [vmem:[%s140 + $0x370] sm:$0xff] %v1332
        %1606 = vst [vmem:[%s140 + $0x378] sm:$0xff] %v1334
        %1607 = vst [vmem:[%s140 + $0x380] sm:$0xff] %v1336
        %1608 = vst [vmem:[%s140 + $0x388] sm:$0xff] %v1338
        %1609 = vst [vmem:[%s140 + $0x390] sm:$0xff] %v1340
        %1610 = vst [vmem:[%s140 + $0x398] sm:$0xff] %v1342
        %1611 = vst [vmem:[%s140 + $0x3a0] sm:$0xff] %v1344
        %1612 = vst [vmem:[%s140 + $0x3a8] sm:$0xff] %v1346
        %1613 = vst [vmem:[%s140 + $0x3b0] sm:$0xff] %v1348
        %1614 = vst [vmem:[%s140 + $0x3b8] sm:$0xff] %v1350
        %1615 = vst [vmem:[%s140 + $0x3c0] sm:$0xff] %v1352
        %1616 = vst [vmem:[%s140 + $0x3c8] sm:$0xff] %v1354
        %1617 = vst [vmem:[%s140 + $0x3d0] sm:$0xff] %v1356
        %1618 = vst [vmem:[%s140 + $0x3d8] sm:$0xff] %v1358
        %1619 = vst [vmem:[%s140 + $0x3e0] sm:$0xff] %v1360
        %1620 = vst [vmem:[%s140 + $0x3e8] sm:$0xff] %v1362
        %1621 = vst [vmem:[%s140 + $0x3f0] sm:$0xff] %v1364
        %1622 = vst [vmem:[%s140 + $0x3f8] sm:$0xff] %v1366
        %1623 = vst [vmem:[%s140 + $0x400] sm:$0xff] %v1368
        %1624 = vst [vmem:[%s140 + $0x408] sm:$0xff] %v1370
        %1625 = vst [vmem:[%s140 + $0x410] sm:$0xff] %v1372
        %1626 = vst [vmem:[%s140 + $0x418] sm:$0xff] %v1374
        %1627 = vst [vmem:[%s140 + $0x420] sm:$0xff] %v1376
        %1628 = vst [vmem:[%s140 + $0x428] sm:$0xff] %v1378
        %1629 = vst [vmem:[%s140 + $0x430] sm:$0xff] %v1380
        %1630 = vst [vmem:[%s140 + $0x438] sm:$0xff] %v1382
        %1631 = vst [vmem:[%s140 + $0x440] sm:$0xff] %v1384
        %1632 = vst [vmem:[%s140 + $0x448] sm:$0xff] %v1386
        %1633 = vst [vmem:[%s140 + $0x450] sm:$0xff] %v1388
        %1634 = vst [vmem:[%s140 + $0x458] sm:$0xff] %v1390
        %1635 = vst [vmem:[%s140 + $0x460] sm:$0xff] %v1392
        %1636 = vst [vmem:[%s140 + $0x468] sm:$0xff] %v1394
        %1637 = vst [vmem:[%s140 + $0x470] sm:$0xff] %v1396
        %1638 = vst [vmem:[%s140 + $0x478] sm:$0xff] %v1398
        %1639 = vst [vmem:[%s140 + $0x480] sm:$0xff] %v1400
        %1640 = vst [vmem:[%s140 + $0x488] sm:$0xff] %v1402
        %1641 = vst [vmem:[%s140 + $0x490] sm:$0xff] %v1404
        %1642 = vst [vmem:[%s140 + $0x498] sm:$0xff] %v1406
        %1643 = vst [vmem:[%s140 + $0x4a0] sm:$0xff] %v1408
        %1644 = vst [vmem:[%s140 + $0x4a8] sm:$0xff] %v1410
        %1645 = vst [vmem:[%s140 + $0x4b0] sm:$0xff] %v1412
        %1646 = vst [vmem:[%s140 + $0x4b8] sm:$0xff] %v1414
        %1647 = vst [vmem:[%s140 + $0x4c0] sm:$0xff] %v1416
        %1648 = vst [vmem:[%s140 + $0x4c8] sm:$0xff] %v1418
        %1649 = vst [vmem:[%s140 + $0x4d0] sm:$0xff] %v1420
        %1650 = vst [vmem:[%s140 + $0x4d8] sm:$0xff] %v1422
        %1651 = vst [vmem:[%s140 + $0x4e0] sm:$0xff] %v1424
        %1652 = vst [vmem:[%s140 + $0x4e8] sm:$0xff] %v1426
        %1653 = vst [vmem:[%s140 + $0x4f0] sm:$0xff] %v1428
        %1654 = vst [vmem:[%s140 + $0x4f8] sm:$0xff] %v1430
        %1655 = vst [vmem:[%s140 + $0x500] sm:$0xff] %v1432
        %1656 = vst [vmem:[%s140 + $0x508] sm:$0xff] %v1434
        %1657 = vst [vmem:[%s140 + $0x510] sm:$0xff] %v1436
        %1658 = vst [vmem:[%s140 + $0x518] sm:$0xff] %v1438
        %1659 = vst [vmem:[%s140 + $0x520] sm:$0xff] %v1440
        %1660 = vst [vmem:[%s140 + $0x528] sm:$0xff] %v1442
        %1661 = vst [vmem:[%s140 + $0x530] sm:$0xff] %v1444
        %1662 = vst [vmem:[%s140 + $0x538] sm:$0xff] %v1446
        %1663 = vst [vmem:[%s140 + $0x540] sm:$0xff] %v1448
        %1664 = vst [vmem:[%s140 + $0x548] sm:$0xff] %v1450
        %1665 = vst [vmem:[%s140 + $0x550] sm:$0xff] %v1452
        %1666 = vst [vmem:[%s140 + $0x558] sm:$0xff] %v1454
        %1667 = vst [vmem:[%s140 + $0x560] sm:$0xff] %v1456
        %1668 = vst [vmem:[%s140 + $0x568] sm:$0xff] %v1458
        %1669 = vst [vmem:[%s140 + $0x570] sm:$0xff] %v1460
        %1670 = vst [vmem:[%s140 + $0x578] sm:$0xff] %v1462
        %1671 = vst [vmem:[%s140 + $0x580] sm:$0xff] %v1464
        %1672 = vst [vmem:[%s140 + $0x588] sm:$0xff] %v1466
        %1673 = vst [vmem:[%s140 + $0x590] sm:$0xff] %v1468
        %1674 = vst [vmem:[%s140 + $0x598] sm:$0xff] %v1470
        %1675 = vst [vmem:[%s140 + $0x5a0] sm:$0xff] %v1472
        %1676 = vst [vmem:[%s140 + $0x5a8] sm:$0xff] %v1474
        %1677 = vst [vmem:[%s140 + $0x5b0] sm:$0xff] %v1476
        %1678 = vst [vmem:[%s140 + $0x5b8] sm:$0xff] %v1478
        %1679 = vst [vmem:[%s140 + $0x5c0] sm:$0xff] %v1480
        %1680 = vst [vmem:[%s140 + $0x5c8] sm:$0xff] %v1482
        %1681 = vst [vmem:[%s140 + $0x5d0] sm:$0xff] %v1484
        %1682 = vst [vmem:[%s140 + $0x5d8] sm:$0xff] %v1486
        %1683 = vst [vmem:[%s140 + $0x5e0] sm:$0xff] %v1488
        %1684 = vst [vmem:[%s140 + $0x5e8] sm:$0xff] %v1490
        %1685 = vst [vmem:[%s140 + $0x5f0] sm:$0xff] %v1492
        %1686 = vst [vmem:[%s140 + $0x5f8] sm:$0xff] %v1494
        %s1687 = sand.u32 %s52, 1
        %s1688 = scalar_lea.sflag [#allocation4], %s1687
        %s1689 = sand.u32 %s52, 1
        %s1690 = smul.addr %s1689, 1536
        %s1691 = scalar_lea.vmem [#allocation5], %s1690
        // Predicated region
        $region29: #{tpu_custom_call.1} parent=23 // pred_check
          %p1692 = pneg %p62
        $region30: #{tpu_custom_call.1} parent=23 // pred_check_branch
          %1694 = sbr.rel (%p1692) target = $region32
        $region31: #{tpu_custom_call.1} parent=23 // pred_region
          %s1695 = smul.u32 192, %s18
          %s1696 = ssub.s32 640, %s1695
          %p1697 = scmp.lt.s32.totalorder %s1696, 192
          %s1698 = scalar_select %p1697, %s1696, 192
          %s1699 = smul.u32 128, %s1698
          %s1701 = ssub.s32 24576, %s1699
          %1702 = vsyncadd %s1688, %s1701
          %p1703 = scmp.ne.s32.totalorder 0, %s1699
          %s1704 = smul.addr %s1695, 128
          %s1705 = scalar_lea.hbm %s1, %s1704
          %s1706 = smul.u32 8, %s1698
          %s1707 = sshll.u32 %s1691, 4
          %s1708 = int_to_ptr.vmem [resolvable:$true] %s1707
          %s1709 = sshll.u32 %s1706, 4
          %1713 = dma.vmem_to_hbm [thread:$0]  (%p1703), %s1708, %s1709, %s1705, %s1688, 128, 128, 8
        $region32: #{tpu_custom_call.1} parent=23 // pred_fallthru
          _
      $region24: #{tpu_custom_call.1} parent=5 // pred_fallthru
        _
      %p1714 = scmp.le.s32.totalorder 2, %s13
      // Predicated region
      $region33: #{tpu_custom_call.1} parent=5 // pred_check
        %p1715 = pneg %p1714
      $region34: #{tpu_custom_call.1} parent=5 // pred_check_branch
        %1717 = sbr.rel (%p1715) target = $region36
      $region35: #{tpu_custom_call.1} parent=5 // pred_region
        %s1718 = ssub.s32 %s13, 2
        // Predicated region
        $region37: #{tpu_custom_call.1} parent=35 // pred_check
          %p1719 = pneg %p68
        $region38: #{tpu_custom_call.1} parent=35 // pred_check_branch
          %1721 = sbr.rel (%p1719) target = $region40
        $region39: #{tpu_custom_call.1} parent=35 // pred_region
          %s1722 = sand.u32 %s53, 1
          %s1723 = scalar_lea.sflag [#allocation4], %s1722
          %s1724 = sand.u32 %s53, 1
          %s1725 = smul.addr %s1724, 1536
          %s1726 = scalar_lea.vmem [#allocation5], %s1725
          %1727 = dma.done %s1723, 24576
        $region40: #{tpu_custom_call.1} parent=35 // pred_fallthru
          _
      $region36: #{tpu_custom_call.1} parent=5 // pred_fallthru
        _
    $region6: #{tpu_custom_call.1} parent=1 // loop_footer
      %s17 = sadd.s32 1, %s13
    $region7: #{tpu_custom_call.1} parent=1 // loop_footer_branch
      %12 = sbr.rel target = $region3
    $region8: #{tpu_custom_call.1} parent=1 // loop_exit
      _
    %1728 = vsyncpa [#allocation3], 1
    %s1729 = scalar_lea.sflag [#allocation3], 1
    %1730 = vsyncpa %s1729, 1
    %1731 = vsyncpa [#allocation4], 1
    %s1732 = scalar_lea.sflag [#allocation4], 1
    %1733 = vsyncpa %s1732, 1

</llo_original>
